<compile_context>
chip_gen: v7x
topology: tpu7x:2x2x1
jax: 0.10.0
libtpu: 0.0.40
codegen_flags: <defaults>
</compile_context>

<pallas_src>
import functools

import jax
import jax.numpy as jnp
from jax.experimental import pallas as pl
from jax.experimental.pallas import tpu as pltpu


def transformer_layer_kernel(
    x_ref,                       # (Bt, N, C)  f32
    ln1w_ref, ln1b_ref,          # (1, C)      f32
    wqkv_ref,                    # (C, 3C)     bf16  (wq*scale | wk | wv fused)
    wproj_ref, bproj_ref,        # (C, C) bf16, (1, C) f32
    ln2w_ref, ln2b_ref,          # (1, C)      f32
    w1_ref, b1_ref,              # (C, HID) bf16, (1, HID) f32
    w2_ref, b2_ref,              # (HID, C) bf16, (1, C) f32
    o_ref,                       # (Bt, N, C)
    *, b_tile, n, c, num_heads, head_dim, eps, hid_tile, kv_tile, use_flash,
):
    bf16 = jnp.bfloat16
    bt, heads, d = b_tile, num_heads, head_dim
    rows = bt * n

    # Flatten the batch tile to (rows, C): every dense projection runs as one
    # large-M MXU matmul instead of N-row slivers.  Reshape only, no transpose.
    x = x_ref[...].reshape(rows, c).astype(jnp.float32)

    # Hoist parameter rows once (JAX does not CSE broadcast_in_dim).
    ln1w, ln1b = ln1w_ref[0], ln1b_ref[0]
    ln2w, ln2b = ln2w_ref[0], ln2b_ref[0]
    bproj, b2 = bproj_ref[0], b2_ref[0]

    def layer_norm(z, w, b):  # f32 statistics
        mu = jnp.mean(z, axis=-1, keepdims=True)
        var = jnp.mean((z - mu) ** 2, axis=-1, keepdims=True)
        return (z - mu) * jax.lax.rsqrt(var + eps) * w + b

    # ---- LN1 + fused QKV projection (bf16 operands, f32 accumulation) ----
    xn = layer_norm(x, ln1w, ln1b).astype(bf16)
    qkv = jnp.dot(xn, wqkv_ref[...], preferred_element_type=jnp.float32)

    # ---- attention: per-head, static lane slices of qkv, no transposes ----
    ctx_parts = []
    for h in range(heads):
        q_h = qkv[:, h * d:(h + 1) * d].reshape(bt, n, d).astype(bf16)
        k_h = qkv[:, c + h * d:c + (h + 1) * d].reshape(bt, n, d).astype(bf16)
        v_h = qkv[:, 2 * c + h * d:2 * c + (h + 1) * d].reshape(bt, n, d).astype(bf16)

        if not use_flash:
            # Short-sequence path: full per-head scores, stable softmax in f32.
            s = jnp.einsum('bnd,bmd->bnm', q_h, k_h,
                           preferred_element_type=jnp.float32)
            s = s - jnp.max(s, axis=-1, keepdims=True)
            e = jnp.exp(s)
            attn = e * pl.reciprocal(jnp.sum(e, axis=-1, keepdims=True),
                                     approx=True)
            ctx_h = jnp.einsum('bnm,bmd->bnd', attn.astype(bf16), v_h,
                               preferred_element_type=jnp.float32)
        else:
            # Long-sequence path: key-tiled online softmax (flash style); the
            # working set stays O(N * kv_tile) per head.
            num_kv = n // kv_tile

            def kv_step(t, carry):
                m_p, l_p, a_p = carry
                start = pl.multiple_of(t * kv_tile, kv_tile)
                k_t = jax.lax.dynamic_slice_in_dim(k_h, start, kv_tile, axis=1)
                v_t = jax.lax.dynamic_slice_in_dim(v_h, start, kv_tile, axis=1)
                s = jnp.einsum('bnd,bmd->bnm', q_h, k_t,
                               preferred_element_type=jnp.float32)
                m_n = jnp.maximum(m_p, jnp.max(s, axis=-1, keepdims=True))
                alpha = jnp.exp(m_p - m_n)
                p = jnp.exp(s - m_n)
                l_n = alpha * l_p + jnp.sum(p, axis=-1, keepdims=True)
                a_n = alpha * a_p + jnp.einsum(
                    'bnm,bmd->bnd', p.astype(bf16), v_t,
                    preferred_element_type=jnp.float32)
                return m_n, l_n, a_n

            m0 = jnp.full((bt, n, 1), -jnp.inf, jnp.float32)
            l0 = jnp.zeros((bt, n, 1), jnp.float32)
            a0 = jnp.zeros((bt, n, d), jnp.float32)
            _, l_f, a_f = jax.lax.fori_loop(0, num_kv, kv_step, (m0, l0, a0))
            ctx_h = a_f / l_f   # exact final normalization (once per output)

        ctx_parts.append(ctx_h.reshape(rows, d))

    # Head-major channel order matches torch's reshape(b, n, c).
    ctx = jnp.concatenate(ctx_parts, axis=-1)                 # (rows, C)
    attn_out = jnp.dot(ctx.astype(bf16), wproj_ref[...],
                       preferred_element_type=jnp.float32) + bproj
    x = x + attn_out                                          # residual 1

    # ---- LN2 + MLP (fc1 -> relu -> fc2); dropout is identity ----
    xn2 = layer_norm(x, ln2w, ln2b).astype(bf16)
    hid = w1_ref.shape[1]
    num_hid = hid // hid_tile
    if num_hid <= 1:
        hcol = jnp.dot(xn2, w1_ref[...],
                       preferred_element_type=jnp.float32) + b1_ref[0]
        hcol = jnp.maximum(hcol, 0.0).astype(bf16)
        mlp = jnp.dot(hcol, w2_ref[...], preferred_element_type=jnp.float32)
    else:
        # fori_loop bounds live ranges of the (rows, hid_tile) intermediates.
        def hid_step(j, acc):
            lo = pl.multiple_of(j * hid_tile, hid_tile)
            hcol = (jnp.dot(xn2, w1_ref[:, pl.ds(lo, hid_tile)],
                            preferred_element_type=jnp.float32)
                    + b1_ref[0, pl.ds(lo, hid_tile)])
            hcol = jnp.maximum(hcol, 0.0).astype(bf16)
            return acc + jnp.dot(hcol, w2_ref[pl.ds(lo, hid_tile), :],
                                 preferred_element_type=jnp.float32)

        mlp = jax.lax.fori_loop(0, num_hid, hid_step,
                                jnp.zeros((rows, c), jnp.float32))
    mlp = mlp + b2

    # Single lane-dense (rows, C) slab store (residual 2).
    o_ref[...] = (x + mlp).reshape(bt, n, c).astype(o_ref.dtype)


# ------------------------------- wrapper ----------------------------------- #

def _vmem_capacity_bytes():
    """Generation-aware physical VMEM (v5e/v6e: 128 MiB, v7x: 64 MiB)."""
    try:  # narrow capability probe only; conservative default otherwise
        cap = int(getattr(pltpu.get_tpu_info(), "vmem_capacity_bytes", 0))
        if cap > 0:
            return cap
    except Exception:
        pass
    return 64 << 20


def _largest_aligned_divisor(n, cap, align=128, floor=64):
    """Largest divisor of n <= cap, preferring multiples of `align`."""
    best = None
    for t in range(1, min(n, cap) + 1):
        if n % t == 0 and t % align == 0:
            best = t
    if best is None:
        for t in range(1, min(n, cap) + 1):
            if n % t == 0 and t >= floor:
                best = t
    return best


def _estimate_vmem_bytes(b_tile, N, C, HID, D, hid_tile, kv_span):
    rows = b_tile * N
    w = 2 * (4 * C * C + 2 * C * HID)        # resident bf16 weights (1-buffered)
    prm = 4 * (6 * C + HID)                  # LN params + biases (f32)
    io = 2 * 2 * rows * C * 4                # double-buffered f32 x / o tiles
    act = 10 * rows * C * 4                  # qkv(3C), ctx, residuals, LN temps
    score = 2 * b_tile * N * kv_span * 4     # one head's scores + exp (f32)
    flash = b_tile * N * (D + 2) * 4         # online-softmax accumulators
    hid_act = rows * hid_tile * 6            # hcol f32 + bf16 copy
    return w + prm + io + act + score + flash + hid_act


def transformer_layer(x, params, *, num_heads):
    """x: (B, N, C) float32. params: f32 linear weights stored (in, out)."""
    B, N, C = x.shape
    assert C % num_heads == 0
    D = C // num_heads
    HID = params['w1'].shape[1]
    scale = float(D) ** -0.5
    eps = 1e-5

    vmem_cap = _vmem_capacity_bytes()
    vmem_budget = int(0.75 * vmem_cap)

    # KV tiling: flash path whenever the per-head (N, N) score tensor would be
    # multi-MiB and N has a usable divisor; smaller kv tiles on 64 MiB parts.
    kv_cap = 256 if vmem_cap <= (64 << 20) else 512
    kv_tile = _largest_aligned_divisor(N, kv_cap) or N
    use_flash = (kv_tile < N) and (N * N * 4 > (2 << 20))
    if not use_flash:
        kv_tile = N
    kv_span = kv_tile if use_flash else N

    hid_tile = HID if HID <= 2048 else (_largest_aligned_divisor(HID, 2048) or HID)
    assert N % kv_tile == 0 and HID % hid_tile == 0

    # Batch tiling: largest divisor of B whose flattened slab fits the budget,
    # rows <= 1024, and grid extent >= 2 whenever B > 1 (megacore / dual-TC).
    # TODO(synk): lower the row cap to ~512 on v5e once the generation is
    # queryable here, and add a true second "parallel" grid axis over query
    # tiles for very long N at tiny batch.
    row_cap = 1024
    b_cap = max(1, B // 2) if B > 1 else 1
    b_tile = 1
    for cand in range(1, b_cap + 1):
        if B % cand or cand * N > row_cap:
            continue
        if _estimate_vmem_bytes(cand, N, C, HID, D, hid_tile, kv_span) <= vmem_budget:
            b_tile = cand
    assert B % b_tile == 0

    est = _estimate_vmem_bytes(b_tile, N, C, HID, D, hid_tile, kv_span)
    vmem_limit = int(min(max(int(1.4 * est), 32 << 20), int(0.85 * vmem_cap)))

    # bf16 weights (half the DMA / VMEM, MXU-native rate); 1/sqrt(d) folded into
    # the q columns (exact: to_queries has no bias).  LN params / biases stay f32.
    wqkv = jnp.concatenate([params['wq'] * scale, params['wkv']],
                           axis=1).astype(jnp.bfloat16)
    wproj = params['wproj'].astype(jnp.bfloat16)
    w1 = params['w1'].astype(jnp.bfloat16)
    w2 = params['w2'].astype(jnp.bfloat16)
    # TODO(synk): for C >= 2048 / very large HID, stream w1/w2 hid-tiles from
    # HBM with pltpu.emit_pipeline instead of keeping them VMEM-resident.

    kernel = functools.partial(
        transformer_layer_kernel,
        b_tile=b_tile, n=N, c=C, num_heads=num_heads, head_dim=D,
        eps=eps, hid_tile=hid_tile, kv_tile=kv_tile, use_flash=use_flash)

    def w_spec(shape):
        # Grid-invariant weights: single-buffer so the pipeline does not keep a
        # useless second copy.  Narrow feature check (construction-time only) --
        # no bare except around the pallas_call, no double compile.
        zero_map = lambda i: (0, 0)
        if hasattr(pl, "Buffered"):
            try:
                return pl.BlockSpec(shape, zero_map, pipeline_mode=pl.Buffered(1))
            except TypeError:
                pass
        return pl.BlockSpec(shape, zero_map)

    out = pl.pallas_call(
        kernel,
        out_shape=jax.ShapeDtypeStruct((B, N, C), x.dtype),
        grid_spec=pltpu.PrefetchScalarGridSpec(
            num_scalar_prefetch=0,
            grid=(B // b_tile,),
            in_specs=[
                pl.BlockSpec((b_tile, N, C), lambda i: (i, 0, 0)),   # x
                w_spec((1, C)), w_spec((1, C)),                      # ln1
                w_spec((C, 3 * C)),                                  # wqkv
                w_spec((C, C)), w_spec((1, C)),                      # proj
                w_spec((1, C)), w_spec((1, C)),                      # ln2
                w_spec((C, HID)), w_spec((1, HID)),                  # fc1
                w_spec((HID, C)), w_spec((1, C)),                    # fc2
            ],
            out_specs=pl.BlockSpec((b_tile, N, C), lambda i: (i, 0, 0)),
        ),
        compiler_params=pltpu.CompilerParams(
            dimension_semantics=("parallel",),
            vmem_limit_bytes=vmem_limit),
    )(x,
      params['ln1_w'], params['ln1_b'],
      wqkv, wproj, params['bproj'],
      params['ln2_w'], params['ln2_b'],
      w1, params['b1'], w2, params['b2'])
    return out


# ----------------------------- reference / test ----------------------------- #

def reference_transformer_layer(x, params, *, num_heads):
    """Pure-JAX f32 reference mirroring the PyTorch forward (eval, no mask)."""
    B, N, C = x.shape
    D = C // num_heads
    scale = float(D) ** -0.5
    eps = 1e-5

    def ln(z, w, b):
        mu = jnp.mean(z, axis=-1, keepdims=True)
        var = jnp.mean((z - mu) ** 2, axis=-1, keepdims=True)
        return (z - mu) * jax.lax.rsqrt(var + eps) * w[0] + b[0]

    xn = ln(x, params['ln1_w'], params['ln1_b'])
    q = xn @ params['wq']                       # (B, N, C)
    kv = xn @ params['wkv']                     # (B, N, 2C)
    k, v = kv[..., :C], kv[..., C:]
    qh = q.reshape(B, N, num_heads, D)
    kh = k.reshape(B, N, num_heads, D)
    vh = v.reshape(B, N, num_heads, D)
    att = jnp.einsum('bnhd,bmhd->bnmh', qh, kh) * scale
    att = jax.nn.softmax(att, axis=2)
    out = jnp.einsum('bnmh,bmhd->bnhd', att, vh).reshape(B, N, C)
    out = out @ params['wproj'] + params['bproj'][0]
    x = x + out
    xn2 = ln(x, params['ln2_w'], params['ln2_b'])
    h = jnp.maximum(xn2 @ params['w1'] + params['b1'][0], 0.0)
    m = h @ params['w2'] + params['b2'][0]
    return x + m


def init_params(key, dim_self, mlp_ratio=4.0):
    C = dim_self
    HID = int(C * mlp_ratio)
    ks = jax.random.split(key, 8)
    s = 0.05
    # All linear weights stored (in_features, out_features), f32.
    return {
        'ln1_w': jnp.ones((1, C), jnp.float32),
        'ln1_b': jnp.zeros((1, C), jnp.float32),
        'wq': s * jax.random.normal(ks[0], (C, C), jnp.float32),
        'wkv': s * jax.random.normal(ks[1], (C, 2 * C), jnp.float32),
        'wproj': s * jax.random.normal(ks[2], (C, C), jnp.float32),
        'bproj': s * jax.random.normal(ks[3], (1, C), jnp.float32),
        'ln2_w': jnp.ones((1, C), jnp.float32),
        'ln2_b': jnp.zeros((1, C), jnp.float32),
        'w1': s * jax.random.normal(ks[4], (C, HID), jnp.float32),
        'b1': s * jax.random.normal(ks[5], (1, HID), jnp.float32),
        'w2': s * jax.random.normal(ks[6], (HID, C), jnp.float32),
        'b2': s * jax.random.normal(ks[7], (1, C), jnp.float32),
    }


if __name__ == "__main__":
    B, N, C = 2, 8, 32
    num_heads = 4

    key = jax.random.PRNGKey(0)
    kx, kp = jax.random.split(key)
    x = jax.random.normal(kx, (B, N, C), jnp.float32)
    params = init_params(kp, C)

    out = transformer_layer(x, params, num_heads=num_heads)
    out = jax.block_until_ready(out)

    ref = reference_transformer_layer(x, params, num_heads=num_heads)
    ref = jax.block_until_ready(ref)

    assert out.shape == (B, N, C)
    err = jnp.max(jnp.abs(out - ref))
    # bf16 matmul operands (f32 accumulation) -> looser tolerance than pure f32.
    assert jnp.allclose(out, ref, atol=2e-2, rtol=2e-2), f"max abs err = {err}"

    print("KERNEL_OK")
</pallas_src>

<mosaic_0001>
module attributes {stable_mosaic.version = 11 : i64} {
  func.func @transformer_layer_kernel(%arg0: i32, %arg1: memref<1x8x32xf32, #tpu.memory_space<vmem>>, %arg2: memref<1x32xf32, #tpu.memory_space<vmem>>, %arg3: memref<1x32xf32, #tpu.memory_space<vmem>>, %arg4: memref<32x96xbf16, #tpu.memory_space<vmem>>, %arg5: memref<32x32xbf16, #tpu.memory_space<vmem>>, %arg6: memref<1x32xf32, #tpu.memory_space<vmem>>, %arg7: memref<1x32xf32, #tpu.memory_space<vmem>>, %arg8: memref<1x32xf32, #tpu.memory_space<vmem>>, %arg9: memref<32x128xbf16, #tpu.memory_space<vmem>>, %arg10: memref<1x128xf32, #tpu.memory_space<vmem>>, %arg11: memref<128x32xbf16, #tpu.memory_space<vmem>>, %arg12: memref<1x32xf32, #tpu.memory_space<vmem>>, %arg13: memref<1x8x32xf32, #tpu.memory_space<vmem>>) attributes {dimension_semantics = [#tpu.dimension_semantics<parallel>], iteration_bounds = array<i64: 2>, scalar_prefetch = 0 : i64, scratch_operands = 0 : i64, tpu.core_type = #tpu.core_type<tc>, window_params = [{transform_indices = @transform_0, window_bounds = array<i64: 1, 8, 32>}, {pipeline_mode = #tpu.pipeline_mode<synchronous>, transform_indices = @transform_1, window_bounds = array<i64: 1, 32>}, {pipeline_mode = #tpu.pipeline_mode<synchronous>, transform_indices = @transform_2, window_bounds = array<i64: 1, 32>}, {pipeline_mode = #tpu.pipeline_mode<synchronous>, transform_indices = @transform_3, window_bounds = array<i64: 32, 96>}, {pipeline_mode = #tpu.pipeline_mode<synchronous>, transform_indices = @transform_4, window_bounds = array<i64: 32, 32>}, {pipeline_mode = #tpu.pipeline_mode<synchronous>, transform_indices = @transform_5, window_bounds = array<i64: 1, 32>}, {pipeline_mode = #tpu.pipeline_mode<synchronous>, transform_indices = @transform_6, window_bounds = array<i64: 1, 32>}, {pipeline_mode = #tpu.pipeline_mode<synchronous>, transform_indices = @transform_7, window_bounds = array<i64: 1, 32>}, {pipeline_mode = #tpu.pipeline_mode<synchronous>, transform_indices = @transform_8, window_bounds = array<i64: 32, 128>}, {pipeline_mode = #tpu.pipeline_mode<synchronous>, transform_indices = @transform_9, window_bounds = array<i64: 1, 128>}, {pipeline_mode = #tpu.pipeline_mode<synchronous>, transform_indices = @transform_10, window_bounds = array<i64: 128, 32>}, {pipeline_mode = #tpu.pipeline_mode<synchronous>, transform_indices = @transform_11, window_bounds = array<i64: 1, 32>}, {transform_indices = @transform_12, window_bounds = array<i64: 1, 8, 32>}]} {
    %c0 = arith.constant 0 : index
    %c0_0 = arith.constant 0 : index
    %c0_1 = arith.constant 0 : index
    %0 = vector.load %arg1[%c0, %c0_0, %c0_1] : memref<1x8x32xf32, #tpu.memory_space<vmem>>, vector<1x8x32xf32>
    %1 = vector.shape_cast %0 : vector<1x8x32xf32> to vector<8x32xf32>
    %c0_2 = arith.constant 0 : index
    %c0_3 = arith.constant 0 : index
    %2 = vector.load %arg2[%c0_2, %c0_3] : memref<1x32xf32, #tpu.memory_space<vmem>>, vector<1x32xf32>
    %3 = vector.shape_cast %2 : vector<1x32xf32> to vector<32xf32>
    %c0_4 = arith.constant 0 : index
    %c0_5 = arith.constant 0 : index
    %4 = vector.load %arg3[%c0_4, %c0_5] : memref<1x32xf32, #tpu.memory_space<vmem>>, vector<1x32xf32>
    %5 = vector.shape_cast %4 : vector<1x32xf32> to vector<32xf32>
    %c0_6 = arith.constant 0 : index
    %c0_7 = arith.constant 0 : index
    %6 = vector.load %arg7[%c0_6, %c0_7] : memref<1x32xf32, #tpu.memory_space<vmem>>, vector<1x32xf32>
    %7 = vector.shape_cast %6 : vector<1x32xf32> to vector<32xf32>
    %c0_8 = arith.constant 0 : index
    %c0_9 = arith.constant 0 : index
    %8 = vector.load %arg8[%c0_8, %c0_9] : memref<1x32xf32, #tpu.memory_space<vmem>>, vector<1x32xf32>
    %9 = vector.shape_cast %8 : vector<1x32xf32> to vector<32xf32>
    %c0_10 = arith.constant 0 : index
    %c0_11 = arith.constant 0 : index
    %10 = vector.load %arg6[%c0_10, %c0_11] : memref<1x32xf32, #tpu.memory_space<vmem>>, vector<1x32xf32>
    %11 = vector.shape_cast %10 : vector<1x32xf32> to vector<32xf32>
    %c0_12 = arith.constant 0 : index
    %c0_13 = arith.constant 0 : index
    %12 = vector.load %arg12[%c0_12, %c0_13] : memref<1x32xf32, #tpu.memory_space<vmem>>, vector<1x32xf32>
    %13 = vector.shape_cast %12 : vector<1x32xf32> to vector<32xf32>
    %cst = arith.constant dense<0.000000e+00> : vector<8xf32>
    %14 = vector.multi_reduction <add>, %1, %cst [1] : vector<8x32xf32> to vector<8xf32>
    %15 = vector.shape_cast %14 : vector<8xf32> to vector<8x1xf32>
    %cst_14 = arith.constant 3.200000e+01 : f32
    %16 = vector.broadcast %cst_14 : f32 to vector<8x1xf32>
    %17 = arith.divf %15, %16 : vector<8x1xf32>
    %18 = vector.broadcast %17 : vector<8x1xf32> to vector<8x32xf32>
    %19 = arith.subf %1, %18 : vector<8x32xf32>
    %20 = arith.mulf %19, %19 : vector<8x32xf32>
    %cst_15 = arith.constant dense<0.000000e+00> : vector<8xf32>
    %21 = vector.multi_reduction <add>, %20, %cst_15 [1] : vector<8x32xf32> to vector<8xf32>
    %22 = vector.shape_cast %21 : vector<8xf32> to vector<8x1xf32>
    %cst_16 = arith.constant 3.200000e+01 : f32
    %23 = vector.broadcast %cst_16 : f32 to vector<8x1xf32>
    %24 = arith.divf %22, %23 : vector<8x1xf32>
    %25 = vector.broadcast %17 : vector<8x1xf32> to vector<8x32xf32>
    %26 = arith.subf %1, %25 : vector<8x32xf32>
    %cst_17 = arith.constant 9.99999974E-6 : f32
    %27 = vector.broadcast %cst_17 : f32 to vector<8x1xf32>
    %28 = arith.addf %24, %27 : vector<8x1xf32>
    %29 = math.rsqrt %28 : vector<8x1xf32>
    %30 = vector.broadcast %29 : vector<8x1xf32> to vector<8x32xf32>
    %31 = arith.mulf %26, %30 : vector<8x32xf32>
    %32 = vector.shape_cast %3 : vector<32xf32> to vector<1x32xf32>
    %33 = vector.broadcast %32 : vector<1x32xf32> to vector<8x32xf32>
    %34 = arith.mulf %31, %33 : vector<8x32xf32>
    %35 = vector.shape_cast %5 : vector<32xf32> to vector<1x32xf32>
    %36 = vector.broadcast %35 : vector<1x32xf32> to vector<8x32xf32>
    %37 = arith.addf %34, %36 : vector<8x32xf32>
    %38 = arith.truncf %37 : vector<8x32xf32> to vector<8x32xbf16>
    %c0_18 = arith.constant 0 : index
    %c0_19 = arith.constant 0 : index
    %39 = vector.load %arg4[%c0_18, %c0_19] : memref<32x96xbf16, #tpu.memory_space<vmem>>, vector<32x96xbf16>
    %cst_20 = arith.constant dense<0.000000e+00> : vector<8x96xf32>
    %40 = tpu.matmul %38, %39, %cst_20 {dimension_numbers = #tpu.dot_dimension_numbers<[1], [0], [0], [1], [0, 0, 1, 1], [], []>} : vector<8x32xbf16>, vector<32x96xbf16>, vector<8x96xf32> -> vector<8x96xf32>
    %41 = vector.extract_strided_slice %40 {offsets = [0, 0], sizes = [8, 8], strides = [1, 1]} : vector<8x96xf32> to vector<8x8xf32>
    %42 = vector.shape_cast %41 : vector<8x8xf32> to vector<1x8x8xf32>
    %43 = arith.truncf %42 : vector<1x8x8xf32> to vector<1x8x8xbf16>
    %44 = vector.extract_strided_slice %40 {offsets = [0, 32], sizes = [8, 8], strides = [1, 1]} : vector<8x96xf32> to vector<8x8xf32>
    %45 = vector.shape_cast %44 : vector<8x8xf32> to vector<1x8x8xf32>
    %46 = arith.truncf %45 : vector<1x8x8xf32> to vector<1x8x8xbf16>
    %47 = vector.extract_strided_slice %40 {offsets = [0, 64], sizes = [8, 8], strides = [1, 1]} : vector<8x96xf32> to vector<8x8xf32>
    %48 = vector.shape_cast %47 : vector<8x8xf32> to vector<1x8x8xf32>
    %49 = arith.truncf %48 : vector<1x8x8xf32> to vector<1x8x8xbf16>
    "tpu.trace_start"() <{level = 10 : i32, message = "bnd,bmd->bnm"}> : () -> ()
    %cst_21 = arith.constant dense<0.000000e+00> : vector<1x8x8xf32>
    %50 = tpu.matmul %43, %46, %cst_21 {dimension_numbers = #tpu.dot_dimension_numbers<[2], [2], [1], [1], [0, 0, 0, 1, 1, 1], [0], [0]>} : vector<1x8x8xbf16>, vector<1x8x8xbf16>, vector<1x8x8xf32> -> vector<1x8x8xf32>
    "tpu.trace_stop"() : () -> ()
    %cst_22 = arith.constant dense<0xFF800000> : vector<1x8xf32>
    %51 = vector.multi_reduction <maximumf>, %50, %cst_22 [2] : vector<1x8x8xf32> to vector<1x8xf32>
    %52 = vector.shape_cast %51 : vector<1x8xf32> to vector<1x8x1xf32>
    %53 = vector.broadcast %52 : vector<1x8x1xf32> to vector<1x8x8xf32>
    %54 = arith.subf %50, %53 : vector<1x8x8xf32>
    %55 = math.exp %54 : vector<1x8x8xf32>
    %cst_23 = arith.constant dense<0.000000e+00> : vector<1x8xf32>
    %56 = vector.multi_reduction <add>, %55, %cst_23 [2] : vector<1x8x8xf32> to vector<1x8xf32>
    %57 = vector.shape_cast %56 : vector<1x8xf32> to vector<1x8x1xf32>
    %58 = tpu.reciprocal %57 {approx = true} : vector<1x8x1xf32> -> vector<1x8x1xf32>
    %59 = vector.broadcast %58 : vector<1x8x1xf32> to vector<1x8x8xf32>
    %60 = arith.mulf %55, %59 : vector<1x8x8xf32>
    %61 = arith.truncf %60 : vector<1x8x8xf32> to vector<1x8x8xbf16>
    "tpu.trace_start"() <{level = 10 : i32, message = "bnm,bmd->bnd"}> : () -> ()
    %cst_24 = arith.constant dense<0.000000e+00> : vector<1x8x8xf32>
    %62 = tpu.matmul %61, %49, %cst_24 {dimension_numbers = #tpu.dot_dimension_numbers<[2], [1], [1], [2], [0, 0, 0, 1, 1, 2], [0], [0]>} : vector<1x8x8xbf16>, vector<1x8x8xbf16>, vector<1x8x8xf32> -> vector<1x8x8xf32>
    "tpu.trace_stop"() : () -> ()
    %63 = vector.shape_cast %62 : vector<1x8x8xf32> to vector<8x8xf32>
    %64 = vector.extract_strided_slice %40 {offsets = [0, 8], sizes = [8, 8], strides = [1, 1]} : vector<8x96xf32> to vector<8x8xf32>
    %65 = vector.shape_cast %64 : vector<8x8xf32> to vector<1x8x8xf32>
    %66 = arith.truncf %65 : vector<1x8x8xf32> to vector<1x8x8xbf16>
    %67 = vector.extract_strided_slice %40 {offsets = [0, 40], sizes = [8, 8], strides = [1, 1]} : vector<8x96xf32> to vector<8x8xf32>
    %68 = vector.shape_cast %67 : vector<8x8xf32> to vector<1x8x8xf32>
    %69 = arith.truncf %68 : vector<1x8x8xf32> to vector<1x8x8xbf16>
    %70 = vector.extract_strided_slice %40 {offsets = [0, 72], sizes = [8, 8], strides = [1, 1]} : vector<8x96xf32> to vector<8x8xf32>
    %71 = vector.shape_cast %70 : vector<8x8xf32> to vector<1x8x8xf32>
    %72 = arith.truncf %71 : vector<1x8x8xf32> to vector<1x8x8xbf16>
    "tpu.trace_start"() <{level = 10 : i32, message = "bnd,bmd->bnm"}> : () -> ()
    %cst_25 = arith.constant dense<0.000000e+00> : vector<1x8x8xf32>
    %73 = tpu.matmul %66, %69, %cst_25 {dimension_numbers = #tpu.dot_dimension_numbers<[2], [2], [1], [1], [0, 0, 0, 1, 1, 1], [0], [0]>} : vector<1x8x8xbf16>, vector<1x8x8xbf16>, vector<1x8x8xf32> -> vector<1x8x8xf32>
    "tpu.trace_stop"() : () -> ()
    %cst_26 = arith.constant dense<0xFF800000> : vector<1x8xf32>
    %74 = vector.multi_reduction <maximumf>, %73, %cst_26 [2] : vector<1x8x8xf32> to vector<1x8xf32>
    %75 = vector.shape_cast %74 : vector<1x8xf32> to vector<1x8x1xf32>
    %76 = vector.broadcast %75 : vector<1x8x1xf32> to vector<1x8x8xf32>
    %77 = arith.subf %73, %76 : vector<1x8x8xf32>
    %78 = math.exp %77 : vector<1x8x8xf32>
    %cst_27 = arith.constant dense<0.000000e+00> : vector<1x8xf32>
    %79 = vector.multi_reduction <add>, %78, %cst_27 [2] : vector<1x8x8xf32> to vector<1x8xf32>
    %80 = vector.shape_cast %79 : vector<1x8xf32> to vector<1x8x1xf32>
    %81 = tpu.reciprocal %80 {approx = true} : vector<1x8x1xf32> -> vector<1x8x1xf32>
    %82 = vector.broadcast %81 : vector<1x8x1xf32> to vector<1x8x8xf32>
    %83 = arith.mulf %78, %82 : vector<1x8x8xf32>
    %84 = arith.truncf %83 : vector<1x8x8xf32> to vector<1x8x8xbf16>
    "tpu.trace_start"() <{level = 10 : i32, message = "bnm,bmd->bnd"}> : () -> ()
    %cst_28 = arith.constant dense<0.000000e+00> : vector<1x8x8xf32>
    %85 = tpu.matmul %84, %72, %cst_28 {dimension_numbers = #tpu.dot_dimension_numbers<[2], [1], [1], [2], [0, 0, 0, 1, 1, 2], [0], [0]>} : vector<1x8x8xbf16>, vector<1x8x8xbf16>, vector<1x8x8xf32> -> vector<1x8x8xf32>
    "tpu.trace_stop"() : () -> ()
    %86 = vector.shape_cast %85 : vector<1x8x8xf32> to vector<8x8xf32>
    %87 = vector.extract_strided_slice %40 {offsets = [0, 16], sizes = [8, 8], strides = [1, 1]} : vector<8x96xf32> to vector<8x8xf32>
    %88 = vector.shape_cast %87 : vector<8x8xf32> to vector<1x8x8xf32>
    %89 = arith.truncf %88 : vector<1x8x8xf32> to vector<1x8x8xbf16>
    %90 = vector.extract_strided_slice %40 {offsets = [0, 48], sizes = [8, 8], strides = [1, 1]} : vector<8x96xf32> to vector<8x8xf32>
    %91 = vector.shape_cast %90 : vector<8x8xf32> to vector<1x8x8xf32>
    %92 = arith.truncf %91 : vector<1x8x8xf32> to vector<1x8x8xbf16>
    %93 = vector.extract_strided_slice %40 {offsets = [0, 80], sizes = [8, 8], strides = [1, 1]} : vector<8x96xf32> to vector<8x8xf32>
    %94 = vector.shape_cast %93 : vector<8x8xf32> to vector<1x8x8xf32>
    %95 = arith.truncf %94 : vector<1x8x8xf32> to vector<1x8x8xbf16>
    "tpu.trace_start"() <{level = 10 : i32, message = "bnd,bmd->bnm"}> : () -> ()
    %cst_29 = arith.constant dense<0.000000e+00> : vector<1x8x8xf32>
    %96 = tpu.matmul %89, %92, %cst_29 {dimension_numbers = #tpu.dot_dimension_numbers<[2], [2], [1], [1], [0, 0, 0, 1, 1, 1], [0], [0]>} : vector<1x8x8xbf16>, vector<1x8x8xbf16>, vector<1x8x8xf32> -> vector<1x8x8xf32>
    "tpu.trace_stop"() : () -> ()
    %cst_30 = arith.constant dense<0xFF800000> : vector<1x8xf32>
    %97 = vector.multi_reduction <maximumf>, %96, %cst_30 [2] : vector<1x8x8xf32> to vector<1x8xf32>
    %98 = vector.shape_cast %97 : vector<1x8xf32> to vector<1x8x1xf32>
    %99 = vector.broadcast %98 : vector<1x8x1xf32> to vector<1x8x8xf32>
    %100 = arith.subf %96, %99 : vector<1x8x8xf32>
    %101 = math.exp %100 : vector<1x8x8xf32>
    %cst_31 = arith.constant dense<0.000000e+00> : vector<1x8xf32>
    %102 = vector.multi_reduction <add>, %101, %cst_31 [2] : vector<1x8x8xf32> to vector<1x8xf32>
    %103 = vector.shape_cast %102 : vector<1x8xf32> to vector<1x8x1xf32>
    %104 = tpu.reciprocal %103 {approx = true} : vector<1x8x1xf32> -> vector<1x8x1xf32>
    %105 = vector.broadcast %104 : vector<1x8x1xf32> to vector<1x8x8xf32>
    %106 = arith.mulf %101, %105 : vector<1x8x8xf32>
    %107 = arith.truncf %106 : vector<1x8x8xf32> to vector<1x8x8xbf16>
    "tpu.trace_start"() <{level = 10 : i32, message = "bnm,bmd->bnd"}> : () -> ()
    %cst_32 = arith.constant dense<0.000000e+00> : vector<1x8x8xf32>
    %108 = tpu.matmul %107, %95, %cst_32 {dimension_numbers = #tpu.dot_dimension_numbers<[2], [1], [1], [2], [0, 0, 0, 1, 1, 2], [0], [0]>} : vector<1x8x8xbf16>, vector<1x8x8xbf16>, vector<1x8x8xf32> -> vector<1x8x8xf32>
    "tpu.trace_stop"() : () -> ()
    %109 = vector.shape_cast %108 : vector<1x8x8xf32> to vector<8x8xf32>
    %110 = vector.extract_strided_slice %40 {offsets = [0, 24], sizes = [8, 8], strides = [1, 1]} : vector<8x96xf32> to vector<8x8xf32>
    %111 = vector.shape_cast %110 : vector<8x8xf32> to vector<1x8x8xf32>
    %112 = arith.truncf %111 : vector<1x8x8xf32> to vector<1x8x8xbf16>
    %113 = vector.extract_strided_slice %40 {offsets = [0, 56], sizes = [8, 8], strides = [1, 1]} : vector<8x96xf32> to vector<8x8xf32>
    %114 = vector.shape_cast %113 : vector<8x8xf32> to vector<1x8x8xf32>
    %115 = arith.truncf %114 : vector<1x8x8xf32> to vector<1x8x8xbf16>
    %116 = vector.extract_strided_slice %40 {offsets = [0, 88], sizes = [8, 8], strides = [1, 1]} : vector<8x96xf32> to vector<8x8xf32>
    %117 = vector.shape_cast %116 : vector<8x8xf32> to vector<1x8x8xf32>
    %118 = arith.truncf %117 : vector<1x8x8xf32> to vector<1x8x8xbf16>
    "tpu.trace_start"() <{level = 10 : i32, message = "bnd,bmd->bnm"}> : () -> ()
    %cst_33 = arith.constant dense<0.000000e+00> : vector<1x8x8xf32>
    %119 = tpu.matmul %112, %115, %cst_33 {dimension_numbers = #tpu.dot_dimension_numbers<[2], [2], [1], [1], [0, 0, 0, 1, 1, 1], [0], [0]>} : vector<1x8x8xbf16>, vector<1x8x8xbf16>, vector<1x8x8xf32> -> vector<1x8x8xf32>
    "tpu.trace_stop"() : () -> ()
    %cst_34 = arith.constant dense<0xFF800000> : vector<1x8xf32>
    %120 = vector.multi_reduction <maximumf>, %119, %cst_34 [2] : vector<1x8x8xf32> to vector<1x8xf32>
    %121 = vector.shape_cast %120 : vector<1x8xf32> to vector<1x8x1xf32>
    %122 = vector.broadcast %121 : vector<1x8x1xf32> to vector<1x8x8xf32>
    %123 = arith.subf %119, %122 : vector<1x8x8xf32>
    %124 = math.exp %123 : vector<1x8x8xf32>
    %cst_35 = arith.constant dense<0.000000e+00> : vector<1x8xf32>
    %125 = vector.multi_reduction <add>, %124, %cst_35 [2] : vector<1x8x8xf32> to vector<1x8xf32>
    %126 = vector.shape_cast %125 : vector<1x8xf32> to vector<1x8x1xf32>
    %127 = tpu.reciprocal %126 {approx = true} : vector<1x8x1xf32> -> vector<1x8x1xf32>
    %128 = vector.broadcast %127 : vector<1x8x1xf32> to vector<1x8x8xf32>
    %129 = arith.mulf %124, %128 : vector<1x8x8xf32>
    %130 = arith.truncf %129 : vector<1x8x8xf32> to vector<1x8x8xbf16>
    "tpu.trace_start"() <{level = 10 : i32, message = "bnm,bmd->bnd"}> : () -> ()
    %cst_36 = arith.constant dense<0.000000e+00> : vector<1x8x8xf32>
    %131 = tpu.matmul %130, %118, %cst_36 {dimension_numbers = #tpu.dot_dimension_numbers<[2], [1], [1], [2], [0, 0, 0, 1, 1, 2], [0], [0]>} : vector<1x8x8xbf16>, vector<1x8x8xbf16>, vector<1x8x8xf32> -> vector<1x8x8xf32>
    "tpu.trace_stop"() : () -> ()
    %132 = vector.shape_cast %131 : vector<1x8x8xf32> to vector<8x8xf32>
    %133 = tpu.concatenate %63, %86, %109, %132 in 1 : vector<8x8xf32>, vector<8x8xf32>, vector<8x8xf32>, vector<8x8xf32> -> vector<8x32xf32>
    %134 = arith.truncf %133 : vector<8x32xf32> to vector<8x32xbf16>
    %c0_37 = arith.constant 0 : index
    %c0_38 = arith.constant 0 : index
    %135 = vector.load %arg5[%c0_37, %c0_38] : memref<32x32xbf16, #tpu.memory_space<vmem>>, vector<32x32xbf16>
    %cst_39 = arith.constant dense<0.000000e+00> : vector<8x32xf32>
    %136 = tpu.matmul %134, %135, %cst_39 {dimension_numbers = #tpu.dot_dimension_numbers<[1], [0], [0], [1], [0, 0, 1, 1], [], []>} : vector<8x32xbf16>, vector<32x32xbf16>, vector<8x32xf32> -> vector<8x32xf32>
    %137 = vector.shape_cast %11 : vector<32xf32> to vector<1x32xf32>
    %138 = vector.broadcast %137 : vector<1x32xf32> to vector<8x32xf32>
    %139 = arith.addf %136, %138 : vector<8x32xf32>
    %140 = arith.addf %1, %139 : vector<8x32xf32>
    %cst_40 = arith.constant dense<0.000000e+00> : vector<8xf32>
    %141 = vector.multi_reduction <add>, %140, %cst_40 [1] : vector<8x32xf32> to vector<8xf32>
    %142 = vector.shape_cast %141 : vector<8xf32> to vector<8x1xf32>
    %cst_41 = arith.constant 3.200000e+01 : f32
    %143 = vector.broadcast %cst_41 : f32 to vector<8x1xf32>
    %144 = arith.divf %142, %143 : vector<8x1xf32>
    %145 = vector.broadcast %144 : vector<8x1xf32> to vector<8x32xf32>
    %146 = arith.subf %140, %145 : vector<8x32xf32>
    %147 = arith.mulf %146, %146 : vector<8x32xf32>
    %cst_42 = arith.constant dense<0.000000e+00> : vector<8xf32>
    %148 = vector.multi_reduction <add>, %147, %cst_42 [1] : vector<8x32xf32> to vector<8xf32>
    %149 = vector.shape_cast %148 : vector<8xf32> to vector<8x1xf32>
    %cst_43 = arith.constant 3.200000e+01 : f32
    %150 = vector.broadcast %cst_43 : f32 to vector<8x1xf32>
    %151 = arith.divf %149, %150 : vector<8x1xf32>
    %152 = vector.broadcast %144 : vector<8x1xf32> to vector<8x32xf32>
    %153 = arith.subf %140, %152 : vector<8x32xf32>
    %cst_44 = arith.constant 9.99999974E-6 : f32
    %154 = vector.broadcast %cst_44 : f32 to vector<8x1xf32>
    %155 = arith.addf %151, %154 : vector<8x1xf32>
    %156 = math.rsqrt %155 : vector<8x1xf32>
    %157 = vector.broadcast %156 : vector<8x1xf32> to vector<8x32xf32>
    %158 = arith.mulf %153, %157 : vector<8x32xf32>
    %159 = vector.shape_cast %7 : vector<32xf32> to vector<1x32xf32>
    %160 = vector.broadcast %159 : vector<1x32xf32> to vector<8x32xf32>
    %161 = arith.mulf %158, %160 : vector<8x32xf32>
    %162 = vector.shape_cast %9 : vector<32xf32> to vector<1x32xf32>
    %163 = vector.broadcast %162 : vector<1x32xf32> to vector<8x32xf32>
    %164 = arith.addf %161, %163 : vector<8x32xf32>
    %165 = arith.truncf %164 : vector<8x32xf32> to vector<8x32xbf16>
    %c0_45 = arith.constant 0 : index
    %c0_46 = arith.constant 0 : index
    %166 = vector.load %arg9[%c0_45, %c0_46] : memref<32x128xbf16, #tpu.memory_space<vmem>>, vector<32x128xbf16>
    %cst_47 = arith.constant dense<0.000000e+00> : vector<8x128xf32>
    %167 = tpu.matmul %165, %166, %cst_47 {dimension_numbers = #tpu.dot_dimension_numbers<[1], [0], [0], [1], [0, 0, 1, 1], [], []>} : vector<8x32xbf16>, vector<32x128xbf16>, vector<8x128xf32> -> vector<8x128xf32>
    %c0_48 = arith.constant 0 : index
    %c0_49 = arith.constant 0 : index
    %168 = vector.load %arg10[%c0_48, %c0_49] : memref<1x128xf32, #tpu.memory_space<vmem>>, vector<1x128xf32>
    %169 = vector.shape_cast %168 : vector<1x128xf32> to vector<128xf32>
    %170 = vector.shape_cast %169 : vector<128xf32> to vector<1x128xf32>
    %171 = vector.broadcast %170 : vector<1x128xf32> to vector<8x128xf32>
    %172 = arith.addf %167, %171 : vector<8x128xf32>
    %cst_50 = arith.constant 0.000000e+00 : f32
    %173 = vector.broadcast %cst_50 : f32 to vector<8x128xf32>
    %174 = arith.maximumf %172, %173 : vector<8x128xf32>
    %175 = arith.truncf %174 : vector<8x128xf32> to vector<8x128xbf16>
    %c0_51 = arith.constant 0 : index
    %c0_52 = arith.constant 0 : index
    %176 = vector.load %arg11[%c0_51, %c0_52] : memref<128x32xbf16, #tpu.memory_space<vmem>>, vector<128x32xbf16>
    %cst_53 = arith.constant dense<0.000000e+00> : vector<8x32xf32>
    %177 = tpu.matmul %175, %176, %cst_53 {dimension_numbers = #tpu.dot_dimension_numbers<[1], [0], [0], [1], [0, 0, 1, 1], [], []>} : vector<8x128xbf16>, vector<128x32xbf16>, vector<8x32xf32> -> vector<8x32xf32>
    %178 = vector.shape_cast %13 : vector<32xf32> to vector<1x32xf32>
    %179 = vector.broadcast %178 : vector<1x32xf32> to vector<8x32xf32>
    %180 = arith.addf %177, %179 : vector<8x32xf32>
    %181 = arith.addf %140, %180 : vector<8x32xf32>
    %182 = vector.shape_cast %181 : vector<8x32xf32> to vector<1x8x32xf32>
    %c0_54 = arith.constant 0 : index
    %c0_55 = arith.constant 0 : index
    %c0_56 = arith.constant 0 : index
    %183 = vector.load %arg13[%c0_54, %c0_55, %c0_56] : memref<1x8x32xf32, #tpu.memory_space<vmem>>, vector<1x8x32xf32>
    tpu.vector_store %arg13[%c0_54, %c0_55, %c0_56], %182 {strides = array<i32>} : memref<1x8x32xf32, #tpu.memory_space<vmem>>, vector<1x8x32xf32>,
    return
  }
  func.func @transform_0(%arg0: i32) -> (i32, i32, i32) {
    %c0_i32 = arith.constant 0 : i32
    %c0_i32_0 = arith.constant 0 : i32
    %c0_i32_1 = arith.constant 0 : i32
    return %arg0, %c0_i32, %c0_i32_0 : i32, i32, i32
  }
  func.func @transform_1(%arg0: i32) -> (i32, i32) {
    %c0_i32 = arith.constant 0 : i32
    %c0_i32_0 = arith.constant 0 : i32
    %c0_i32_1 = arith.constant 0 : i32
    return %c0_i32, %c0_i32_0 : i32, i32
  }
  func.func @transform_2(%arg0: i32) -> (i32, i32) {
    %c0_i32 = arith.constant 0 : i32
    %c0_i32_0 = arith.constant 0 : i32
    %c0_i32_1 = arith.constant 0 : i32
    return %c0_i32, %c0_i32_0 : i32, i32
  }
  func.func @transform_3(%arg0: i32) -> (i32, i32) {
    %c0_i32 = arith.constant 0 : i32
    %c0_i32_0 = arith.constant 0 : i32
    %c0_i32_1 = arith.constant 0 : i32
    return %c0_i32, %c0_i32_0 : i32, i32
  }
  func.func @transform_4(%arg0: i32) -> (i32, i32) {
    %c0_i32 = arith.constant 0 : i32
    %c0_i32_0 = arith.constant 0 : i32
    %c0_i32_1 = arith.constant 0 : i32
    return %c0_i32, %c0_i32_0 : i32, i32
  }
  func.func @transform_5(%arg0: i32) -> (i32, i32) {
    %c0_i32 = arith.constant 0 : i32
    %c0_i32_0 = arith.constant 0 : i32
    %c0_i32_1 = arith.constant 0 : i32
    return %c0_i32, %c0_i32_0 : i32, i32
  }
  func.func @transform_6(%arg0: i32) -> (i32, i32) {
    %c0_i32 = arith.constant 0 : i32
    %c0_i32_0 = arith.constant 0 : i32
    %c0_i32_1 = arith.constant 0 : i32
    return %c0_i32, %c0_i32_0 : i32, i32
  }
  func.func @transform_7(%arg0: i32) -> (i32, i32) {
    %c0_i32 = arith.constant 0 : i32
    %c0_i32_0 = arith.constant 0 : i32
    %c0_i32_1 = arith.constant 0 : i32
    return %c0_i32, %c0_i32_0 : i32, i32
  }
  func.func @transform_8(%arg0: i32) -> (i32, i32) {
    %c0_i32 = arith.constant 0 : i32
    %c0_i32_0 = arith.constant 0 : i32
    %c0_i32_1 = arith.constant 0 : i32
    return %c0_i32, %c0_i32_0 : i32, i32
  }
  func.func @transform_9(%arg0: i32) -> (i32, i32) {
    %c0_i32 = arith.constant 0 : i32
    %c0_i32_0 = arith.constant 0 : i32
    %c0_i32_1 = arith.constant 0 : i32
    return %c0_i32, %c0_i32_0 : i32, i32
  }
  func.func @transform_10(%arg0: i32) -> (i32, i32) {
    %c0_i32 = arith.constant 0 : i32
    %c0_i32_0 = arith.constant 0 : i32
    %c0_i32_1 = arith.constant 0 : i32
    return %c0_i32, %c0_i32_0 : i32, i32
  }
  func.func @transform_11(%arg0: i32) -> (i32, i32) {
    %c0_i32 = arith.constant 0 : i32
    %c0_i32_0 = arith.constant 0 : i32
    %c0_i32_1 = arith.constant 0 : i32
    return %c0_i32, %c0_i32_0 : i32, i32
  }
  func.func @transform_12(%arg0: i32) -> (i32, i32, i32) {
    %c0_i32 = arith.constant 0 : i32
    %c0_i32_0 = arith.constant 0 : i32
    %c0_i32_1 = arith.constant 0 : i32
    return %arg0, %c0_i32, %c0_i32_0 : i32, i32, i32
  }
}

</mosaic_0001>

<llo_original>
// kernel: tpu_custom_call.1
$region0: #{tpu_custom_call.1}
  #allocation0 [shape = 'u32[]', space=smem, size = 0x4, offset = 0x4, fixed_abs, tag = 'smem constant byte address 0x4 - core index']
  #allocation1 [shape = 'u32[144,128]{1,0:T(1,128)}', space=vmem, size = 0x12000, scoped, tag = 'internal scratch']
  %s0 = inlined_call_operand.vmem [shape: f32[2,8,32], index: 0, kind: input, shape index: {}]
  %s1 = inlined_call_operand.vmem [shape: f32[1,32], index: 1, kind: input, shape index: {}]
  %s2 = inlined_call_operand.vmem [shape: f32[1,32], index: 2, kind: input, shape index: {}]
  %s3 = inlined_call_operand.vmem [shape: bf16[32,96], index: 3, kind: input, shape index: {}]
  %s4 = inlined_call_operand.vmem [shape: bf16[32,32], index: 4, kind: input, shape index: {}]
  %s5 = inlined_call_operand.vmem [shape: f32[1,32], index: 5, kind: input, shape index: {}]
  %s6 = inlined_call_operand.vmem [shape: f32[1,32], index: 6, kind: input, shape index: {}]
  %s7 = inlined_call_operand.vmem [shape: f32[1,32], index: 7, kind: input, shape index: {}]
  %s8 = inlined_call_operand.vmem [shape: bf16[32,128], index: 8, kind: input, shape index: {}]
  %s9 = inlined_call_operand.vmem [shape: f32[1,128], index: 9, kind: input, shape index: {}]
  %s10 = inlined_call_operand.vmem [shape: bf16[128,32], index: 10, kind: input, shape index: {}]
  %s11 = inlined_call_operand.vmem [shape: f32[1,32], index: 11, kind: input, shape index: {}]
  %s12 = inlined_call_operand.hbm [shape: f32[2,8,32], index: 12, kind: output, shape index: {}]
  %s13 = sld [smem:[#allocation0]]
  $region81: #{tpu_custom_call.1} parent=0
    _
  %s15 = ssub.s32 1, %s13
  %s16 = scalar_select 0, %s15, %s13
  $region1: #{tpu_custom_call.1} parent=0
    #allocation2 [shape = 'u8[8192]{0}', space=vmem, size = 0x2000, scoped, tag = 'output window, operand 0']
    #allocation3 [shape = 's32[2]{0}', space=sflag, size = 0x8, scoped, tag = 'scoped memory for tpu_custom_call.1']
    %17 = vsyncpa [#allocation3], 0
    %s18 = scalar_lea.sflag [#allocation3], 1
    %19 = vsyncpa %s18, 0
    loop: start=0, step=1, limit=4
    $region2: #{tpu_custom_call.1} parent=1 // loop_pre_header
      _
    $region3: #{tpu_custom_call.1} parent=1 // loop_header
      %s21 = sphi 0, %s25
      %p22 = scmp.ge.s32.totalorder %s21, 4
      %s31 = sphi 0, %s33
      %s34 = sphi 0, %s31
      %s35 = sphi 0, %s34
      %s51 = sphi 0, %s35
      %s55 = sphi 0, %s55
      %s57 = sphi 0, %s55
      %s58 = sphi 0, %s57
      %s72 = sphi 0, %s58
      %s76 = sphi 0, %s76
      %s78 = sphi 0, %s76
      %s79 = sphi 0, %s78
      %s93 = sphi 0, %s79
      %s97 = sphi 0, %s97
      %s99 = sphi 0, %s97
      %s100 = sphi 0, %s99
      %s114 = sphi 0, %s100
      %s118 = sphi 0, %s118
      %s120 = sphi 0, %s118
      %s121 = sphi 0, %s120
      %s135 = sphi 0, %s121
      %s139 = sphi 0, %s139
      %s141 = sphi 0, %s139
      %s142 = sphi 0, %s141
      %s156 = sphi 0, %s142
      %s160 = sphi 0, %s160
      %s162 = sphi 0, %s160
      %s163 = sphi 0, %s162
      %s177 = sphi 0, %s163
      %s181 = sphi 0, %s181
      %s183 = sphi 0, %s181
      %s184 = sphi 0, %s183
      %s198 = sphi 0, %s184
      %s202 = sphi 0, %s202
      %s204 = sphi 0, %s202
      %s205 = sphi 0, %s204
      %s219 = sphi 0, %s205
      %s223 = sphi 0, %s223
      %s225 = sphi 0, %s223
      %s226 = sphi 0, %s225
      %s240 = sphi 0, %s226
      %s244 = sphi 0, %s244
      %s246 = sphi 0, %s244
      %s247 = sphi 0, %s246
      %s261 = sphi 0, %s247
      %s265 = sphi 0, %s265
      %s267 = sphi 0, %s265
      %s268 = sphi 0, %s267
      %s282 = sphi 0, %s268
      %s288 = sphi 0, %s290
      %s291 = sphi 0, %s288
      %s292 = sphi 0, %s291
      %s308 = sphi 0, %s292
    $region4: #{tpu_custom_call.1} parent=1 // loop_header_branch
      %24 = sbr.rel (%p22) target = $region8
    $region5: #{tpu_custom_call.1} parent=1 // loop_body
      %s26 = ssub.s32 %s21, 1
      %s27 = ssub.s32 %s21, 2
      %s28 = sadd.s32 %s21, 1
      %s29 = ssub.s32 %s21, %s28
      %p30 = scmp.eq.s32.totalorder %s29, 0
      %s32 = sadd.s32 %s31, 1
      %s33 = scalar_select %p30, %s31, %s32
      %p36 = pneg %p30
      %p37 = scmp.eq.s32.totalorder %s21, 1
      %p38 = por %p36, %p37
      %p39 = scmp.ne.s32.totalorder %s31, %s34
      %p40 = scmp.eq.s32.totalorder %s21, 0
      %p41 = por %p39, %p40
      %p42 = scmp.ne.s32.totalorder %s31, %s34
      %p43 = scmp.eq.s32.totalorder %s26, 1
      %p44 = por %p42, %p43
      %p45 = scmp.ne.s32.totalorder %s34, %s35
      %p46 = scmp.eq.s32.totalorder %s26, 0
      %p47 = por %p45, %p46
      %p48 = scmp.ne.s32.totalorder %s34, %s35
      %p49 = scmp.eq.s32.totalorder %s27, 1
      %p50 = por %p48, %p49
      %p52 = scmp.ne.s32.totalorder %s35, %s51
      %p53 = scmp.eq.s32.totalorder %s27, 0
      %p54 = por %p52, %p53
      %s56 = sadd.s32 %s55, 1
      %p59 = scmp.eq.s32.totalorder %s21, 1
      %p60 = scmp.ne.s32.totalorder %s55, %s57
      %p61 = scmp.eq.s32.totalorder %s21, 0
      %p62 = por %p60, %p61
      %p63 = scmp.ne.s32.totalorder %s55, %s57
      %p64 = scmp.eq.s32.totalorder %s26, 1
      %p65 = por %p63, %p64
      %p66 = scmp.ne.s32.totalorder %s57, %s58
      %p67 = scmp.eq.s32.totalorder %s26, 0
      %p68 = por %p66, %p67
      %p69 = scmp.ne.s32.totalorder %s57, %s58
      %p70 = scmp.eq.s32.totalorder %s27, 1
      %p71 = por %p69, %p70
      %p73 = scmp.ne.s32.totalorder %s58, %s72
      %p74 = scmp.eq.s32.totalorder %s27, 0
      %p75 = por %p73, %p74
      %s77 = sadd.s32 %s76, 1
      %p80 = scmp.eq.s32.totalorder %s21, 1
      %p81 = scmp.ne.s32.totalorder %s76, %s78
      %p82 = scmp.eq.s32.totalorder %s21, 0
      %p83 = por %p81, %p82
      %p84 = scmp.ne.s32.totalorder %s76, %s78
      %p85 = scmp.eq.s32.totalorder %s26, 1
      %p86 = por %p84, %p85
      %p87 = scmp.ne.s32.totalorder %s78, %s79
      %p88 = scmp.eq.s32.totalorder %s26, 0
      %p89 = por %p87, %p88
      %p90 = scmp.ne.s32.totalorder %s78, %s79
      %p91 = scmp.eq.s32.totalorder %s27, 1
      %p92 = por %p90, %p91
      %p94 = scmp.ne.s32.totalorder %s79, %s93
      %p95 = scmp.eq.s32.totalorder %s27, 0
      %p96 = por %p94, %p95
      %s98 = sadd.s32 %s97, 1
      %p101 = scmp.eq.s32.totalorder %s21, 1
      %p102 = scmp.ne.s32.totalorder %s97, %s99
      %p103 = scmp.eq.s32.totalorder %s21, 0
      %p104 = por %p102, %p103
      %p105 = scmp.ne.s32.totalorder %s97, %s99
      %p106 = scmp.eq.s32.totalorder %s26, 1
      %p107 = por %p105, %p106
      %p108 = scmp.ne.s32.totalorder %s99, %s100
      %p109 = scmp.eq.s32.totalorder %s26, 0
      %p110 = por %p108, %p109
      %p111 = scmp.ne.s32.totalorder %s99, %s100
      %p112 = scmp.eq.s32.totalorder %s27, 1
      %p113 = por %p111, %p112
      %p115 = scmp.ne.s32.totalorder %s100, %s114
      %p116 = scmp.eq.s32.totalorder %s27, 0
      %p117 = por %p115, %p116
      %s119 = sadd.s32 %s118, 1
      %p122 = scmp.eq.s32.totalorder %s21, 1
      %p123 = scmp.ne.s32.totalorder %s118, %s120
      %p124 = scmp.eq.s32.totalorder %s21, 0
      %p125 = por %p123, %p124
      %p126 = scmp.ne.s32.totalorder %s118, %s120
      %p127 = scmp.eq.s32.totalorder %s26, 1
      %p128 = por %p126, %p127
      %p129 = scmp.ne.s32.totalorder %s120, %s121
      %p130 = scmp.eq.s32.totalorder %s26, 0
      %p131 = por %p129, %p130
      %p132 = scmp.ne.s32.totalorder %s120, %s121
      %p133 = scmp.eq.s32.totalorder %s27, 1
      %p134 = por %p132, %p133
      %p136 = scmp.ne.s32.totalorder %s121, %s135
      %p137 = scmp.eq.s32.totalorder %s27, 0
      %p138 = por %p136, %p137
      %s140 = sadd.s32 %s139, 1
      %p143 = scmp.eq.s32.totalorder %s21, 1
      %p144 = scmp.ne.s32.totalorder %s139, %s141
      %p145 = scmp.eq.s32.totalorder %s21, 0
      %p146 = por %p144, %p145
      %p147 = scmp.ne.s32.totalorder %s139, %s141
      %p148 = scmp.eq.s32.totalorder %s26, 1
      %p149 = por %p147, %p148
      %p150 = scmp.ne.s32.totalorder %s141, %s142
      %p151 = scmp.eq.s32.totalorder %s26, 0
      %p152 = por %p150, %p151
      %p153 = scmp.ne.s32.totalorder %s141, %s142
      %p154 = scmp.eq.s32.totalorder %s27, 1
      %p155 = por %p153, %p154
      %p157 = scmp.ne.s32.totalorder %s142, %s156
      %p158 = scmp.eq.s32.totalorder %s27, 0
      %p159 = por %p157, %p158
      %s161 = sadd.s32 %s160, 1
      %p164 = scmp.eq.s32.totalorder %s21, 1
      %p165 = scmp.ne.s32.totalorder %s160, %s162
      %p166 = scmp.eq.s32.totalorder %s21, 0
      %p167 = por %p165, %p166
      %p168 = scmp.ne.s32.totalorder %s160, %s162
      %p169 = scmp.eq.s32.totalorder %s26, 1
      %p170 = por %p168, %p169
      %p171 = scmp.ne.s32.totalorder %s162, %s163
      %p172 = scmp.eq.s32.totalorder %s26, 0
      %p173 = por %p171, %p172
      %p174 = scmp.ne.s32.totalorder %s162, %s163
      %p175 = scmp.eq.s32.totalorder %s27, 1
      %p176 = por %p174, %p175
      %p178 = scmp.ne.s32.totalorder %s163, %s177
      %p179 = scmp.eq.s32.totalorder %s27, 0
      %p180 = por %p178, %p179
      %s182 = sadd.s32 %s181, 1
      %p185 = scmp.eq.s32.totalorder %s21, 1
      %p186 = scmp.ne.s32.totalorder %s181, %s183
      %p187 = scmp.eq.s32.totalorder %s21, 0
      %p188 = por %p186, %p187
      %p189 = scmp.ne.s32.totalorder %s181, %s183
      %p190 = scmp.eq.s32.totalorder %s26, 1
      %p191 = por %p189, %p190
      %p192 = scmp.ne.s32.totalorder %s183, %s184
      %p193 = scmp.eq.s32.totalorder %s26, 0
      %p194 = por %p192, %p193
      %p195 = scmp.ne.s32.totalorder %s183, %s184
      %p196 = scmp.eq.s32.totalorder %s27, 1
      %p197 = por %p195, %p196
      %p199 = scmp.ne.s32.totalorder %s184, %s198
      %p200 = scmp.eq.s32.totalorder %s27, 0
      %p201 = por %p199, %p200
      %s203 = sadd.s32 %s202, 1
      %p206 = scmp.eq.s32.totalorder %s21, 1
      %p207 = scmp.ne.s32.totalorder %s202, %s204
      %p208 = scmp.eq.s32.totalorder %s21, 0
      %p209 = por %p207, %p208
      %p210 = scmp.ne.s32.totalorder %s202, %s204
      %p211 = scmp.eq.s32.totalorder %s26, 1
      %p212 = por %p210, %p211
      %p213 = scmp.ne.s32.totalorder %s204, %s205
      %p214 = scmp.eq.s32.totalorder %s26, 0
      %p215 = por %p213, %p214
      %p216 = scmp.ne.s32.totalorder %s204, %s205
      %p217 = scmp.eq.s32.totalorder %s27, 1
      %p218 = por %p216, %p217
      %p220 = scmp.ne.s32.totalorder %s205, %s219
      %p221 = scmp.eq.s32.totalorder %s27, 0
      %p222 = por %p220, %p221
      %s224 = sadd.s32 %s223, 1
      %p227 = scmp.eq.s32.totalorder %s21, 1
      %p228 = scmp.ne.s32.totalorder %s223, %s225
      %p229 = scmp.eq.s32.totalorder %s21, 0
      %p230 = por %p228, %p229
      %p231 = scmp.ne.s32.totalorder %s223, %s225
      %p232 = scmp.eq.s32.totalorder %s26, 1
      %p233 = por %p231, %p232
      %p234 = scmp.ne.s32.totalorder %s225, %s226
      %p235 = scmp.eq.s32.totalorder %s26, 0
      %p236 = por %p234, %p235
      %p237 = scmp.ne.s32.totalorder %s225, %s226
      %p238 = scmp.eq.s32.totalorder %s27, 1
      %p239 = por %p237, %p238
      %p241 = scmp.ne.s32.totalorder %s226, %s240
      %p242 = scmp.eq.s32.totalorder %s27, 0
      %p243 = por %p241, %p242
      %s245 = sadd.s32 %s244, 1
      %p248 = scmp.eq.s32.totalorder %s21, 1
      %p249 = scmp.ne.s32.totalorder %s244, %s246
      %p250 = scmp.eq.s32.totalorder %s21, 0
      %p251 = por %p249, %p250
      %p252 = scmp.ne.s32.totalorder %s244, %s246
      %p253 = scmp.eq.s32.totalorder %s26, 1
      %p254 = por %p252, %p253
      %p255 = scmp.ne.s32.totalorder %s246, %s247
      %p256 = scmp.eq.s32.totalorder %s26, 0
      %p257 = por %p255, %p256
      %p258 = scmp.ne.s32.totalorder %s246, %s247
      %p259 = scmp.eq.s32.totalorder %s27, 1
      %p260 = por %p258, %p259
      %p262 = scmp.ne.s32.totalorder %s247, %s261
      %p263 = scmp.eq.s32.totalorder %s27, 0
      %p264 = por %p262, %p263
      %s266 = sadd.s32 %s265, 1
      %p269 = scmp.eq.s32.totalorder %s21, 1
      %p270 = scmp.ne.s32.totalorder %s265, %s267
      %p271 = scmp.eq.s32.totalorder %s21, 0
      %p272 = por %p270, %p271
      %p273 = scmp.ne.s32.totalorder %s265, %s267
      %p274 = scmp.eq.s32.totalorder %s26, 1
      %p275 = por %p273, %p274
      %p276 = scmp.ne.s32.totalorder %s267, %s268
      %p277 = scmp.eq.s32.totalorder %s26, 0
      %p278 = por %p276, %p277
      %p279 = scmp.ne.s32.totalorder %s267, %s268
      %p280 = scmp.eq.s32.totalorder %s27, 1
      %p281 = por %p279, %p280
      %p283 = scmp.ne.s32.totalorder %s268, %s282
      %p284 = scmp.eq.s32.totalorder %s27, 0
      %p285 = por %p283, %p284
      %s286 = ssub.s32 %s21, %s28
      %p287 = scmp.eq.s32.totalorder %s286, 0
      %s289 = sadd.s32 %s288, 1
      %s290 = scalar_select %p287, %s288, %s289
      %p293 = pneg %p287
      %p294 = scmp.eq.s32.totalorder %s21, 1
      %p295 = por %p293, %p294
      %p296 = scmp.ne.s32.totalorder %s288, %s291
      %p297 = scmp.eq.s32.totalorder %s21, 0
      %p298 = por %p296, %p297
      %p299 = scmp.ne.s32.totalorder %s288, %s291
      %p300 = scmp.eq.s32.totalorder %s26, 1
      %p301 = por %p299, %p300
      %p302 = scmp.ne.s32.totalorder %s291, %s292
      %p303 = scmp.eq.s32.totalorder %s26, 0
      %p304 = por %p302, %p303
      %p305 = scmp.ne.s32.totalorder %s291, %s292
      %p306 = scmp.eq.s32.totalorder %s27, 1
      %p307 = por %p305, %p306
      %p309 = scmp.ne.s32.totalorder %s292, %s308
      %p310 = scmp.eq.s32.totalorder %s27, 0
      %p311 = por %p309, %p310
      %p312 = scmp.le.s32.totalorder 1, %s21
      %p313 = scmp.lt.s32.totalorder %s21, 3
      %p314 = pnand %p312, %p313
      %p315 = pneg %p314
      // Predicated region
      $region9: #{tpu_custom_call.1} parent=5 // pred_check
        _
      $region10: #{tpu_custom_call.1} parent=5 // pred_check_branch
        %317 = sbr.rel (%p314) target = $region12
      $region11: #{tpu_custom_call.1} parent=5 // pred_region
        %s318 = ssub.s32 %s21, 1
        // Predicated region
        $region13: #{tpu_custom_call.1} parent=11 // pred_check
          %p319 = pneg %p68
        $region14: #{tpu_custom_call.1} parent=11 // pred_check_branch
          %321 = sbr.rel (%p319) target = $region16
        $region15: #{tpu_custom_call.1} parent=11 // pred_region
          _
        $region16: #{tpu_custom_call.1} parent=11 // pred_fallthru
          _
        // Predicated region
        $region17: #{tpu_custom_call.1} parent=11 // pred_check
          %p322 = pneg %p89
        $region18: #{tpu_custom_call.1} parent=11 // pred_check_branch
          %324 = sbr.rel (%p322) target = $region20
        $region19: #{tpu_custom_call.1} parent=11 // pred_region
          _
        $region20: #{tpu_custom_call.1} parent=11 // pred_fallthru
          _
        // Predicated region
        $region21: #{tpu_custom_call.1} parent=11 // pred_check
          %p325 = pneg %p110
        $region22: #{tpu_custom_call.1} parent=11 // pred_check_branch
          %327 = sbr.rel (%p325) target = $region24
        $region23: #{tpu_custom_call.1} parent=11 // pred_region
          _
        $region24: #{tpu_custom_call.1} parent=11 // pred_fallthru
          _
        // Predicated region
        $region25: #{tpu_custom_call.1} parent=11 // pred_check
          %p328 = pneg %p131
        $region26: #{tpu_custom_call.1} parent=11 // pred_check_branch
          %330 = sbr.rel (%p328) target = $region28
        $region27: #{tpu_custom_call.1} parent=11 // pred_region
          _
        $region28: #{tpu_custom_call.1} parent=11 // pred_fallthru
          _
        // Predicated region
        $region29: #{tpu_custom_call.1} parent=11 // pred_check
          %p331 = pneg %p152
        $region30: #{tpu_custom_call.1} parent=11 // pred_check_branch
          %333 = sbr.rel (%p331) target = $region32
        $region31: #{tpu_custom_call.1} parent=11 // pred_region
          _
        $region32: #{tpu_custom_call.1} parent=11 // pred_fallthru
          _
        // Predicated region
        $region33: #{tpu_custom_call.1} parent=11 // pred_check
          %p334 = pneg %p173
        $region34: #{tpu_custom_call.1} parent=11 // pred_check_branch
          %336 = sbr.rel (%p334) target = $region36
        $region35: #{tpu_custom_call.1} parent=11 // pred_region
          _
        $region36: #{tpu_custom_call.1} parent=11 // pred_fallthru
          _
        // Predicated region
        $region37: #{tpu_custom_call.1} parent=11 // pred_check
          %p337 = pneg %p194
        $region38: #{tpu_custom_call.1} parent=11 // pred_check_branch
          %339 = sbr.rel (%p337) target = $region40
        $region39: #{tpu_custom_call.1} parent=11 // pred_region
          _
        $region40: #{tpu_custom_call.1} parent=11 // pred_fallthru
          _
        // Predicated region
        $region41: #{tpu_custom_call.1} parent=11 // pred_check
          %p340 = pneg %p215
        $region42: #{tpu_custom_call.1} parent=11 // pred_check_branch
          %342 = sbr.rel (%p340) target = $region44
        $region43: #{tpu_custom_call.1} parent=11 // pred_region
          _
        $region44: #{tpu_custom_call.1} parent=11 // pred_fallthru
          _
        // Predicated region
        $region45: #{tpu_custom_call.1} parent=11 // pred_check
          %p343 = pneg %p236
        $region46: #{tpu_custom_call.1} parent=11 // pred_check_branch
          %345 = sbr.rel (%p343) target = $region48
        $region47: #{tpu_custom_call.1} parent=11 // pred_region
          _
        $region48: #{tpu_custom_call.1} parent=11 // pred_fallthru
          _
        // Predicated region
        $region49: #{tpu_custom_call.1} parent=11 // pred_check
          %p346 = pneg %p257
        $region50: #{tpu_custom_call.1} parent=11 // pred_check_branch
          %348 = sbr.rel (%p346) target = $region52
        $region51: #{tpu_custom_call.1} parent=11 // pred_region
          _
        $region52: #{tpu_custom_call.1} parent=11 // pred_fallthru
          _
        // Predicated region
        $region53: #{tpu_custom_call.1} parent=11 // pred_check
          %p349 = pneg %p278
        $region54: #{tpu_custom_call.1} parent=11 // pred_check_branch
          %351 = sbr.rel (%p349) target = $region56
        $region55: #{tpu_custom_call.1} parent=11 // pred_region
          _
        $region56: #{tpu_custom_call.1} parent=11 // pred_fallthru
          _
      $region12: #{tpu_custom_call.1} parent=5 // pred_fallthru
        _
      %p352 = scmp.lt.s32.totalorder %s21, 2
      // Predicated region
      $region57: #{tpu_custom_call.1} parent=5 // pred_check
        %p353 = pneg %p352
      $region58: #{tpu_custom_call.1} parent=5 // pred_check_branch
        %355 = sbr.rel (%p353) target = $region60
      $region59: #{tpu_custom_call.1} parent=5 // pred_region
        // Predicated region
        $region61: #{tpu_custom_call.1} parent=59 // pred_check
          %p356 = pneg %p41
        $region62: #{tpu_custom_call.1} parent=59 // pred_check_branch
          %358 = sbr.rel (%p356) target = $region64
        $region63: #{tpu_custom_call.1} parent=59 // pred_region
          %p359 = scmp.lt.s32.totalorder %s21, 1
          %s360 = scalar_select %p359, %s21, 1
          %s361 = smul.addr %s360, 8
          %s362 = scalar_lea.vmem %s0, %s361
        $region64: #{tpu_custom_call.1} parent=59 // pred_fallthru
          _
      $region60: #{tpu_custom_call.1} parent=5 // pred_fallthru
        _
      %p363 = scmp.le.s32.totalorder 1, %s21
      %p364 = scmp.lt.s32.totalorder %s21, 3
      %p365 = pnand %p363, %p364
      %p366 = pneg %p365
      // Predicated region
      $region65: #{tpu_custom_call.1} parent=5 // pred_check
        _
      $region66: #{tpu_custom_call.1} parent=5 // pred_check_branch
        %368 = sbr.rel (%p365) target = $region68
      $region67: #{tpu_custom_call.1} parent=5 // pred_region
        %s369 = ssub.s32 %s21, 1
        %p370 = scmp.lt.s32.totalorder %s26, 1
        %s371 = scalar_select %p370, %s26, 1
        %s372 = smul.addr %s371, 8
        %s373 = scalar_lea.vmem %s0, %s372
        %p374 = pneg %p47
        %p375 = pneg %p44
        %p376 = pneg %p68
        %p377 = pneg %p65
        %p378 = pneg %p89
        %p379 = pneg %p86
        %p380 = pneg %p110
        %p381 = pneg %p107
        %p382 = pneg %p131
        %p383 = pneg %p128
        %p384 = pneg %p152
        %p385 = pneg %p149
        %p386 = pneg %p173
        %p387 = pneg %p170
        %p388 = pneg %p194
        %p389 = pneg %p191
        %p390 = pneg %p215
        %p391 = pneg %p212
        %p392 = pneg %p236
        %p393 = pneg %p233
        %p394 = pneg %p257
        %p395 = pneg %p254
        %p396 = pneg %p278
        %p397 = pneg %p275
        %p398 = pneg %p304
        %p399 = pneg %p301
        %s400 = sand.u32 %s291, 1
        %s401 = scalar_lea.sflag [#allocation3], %s400
        %s402 = sand.u32 %s291, 1
        %s403 = smul.addr %s402, 8
        %s404 = scalar_lea.vmem [#allocation2], %s403
        %p405 = scmp.lt.s32.totalorder %s26, 1
        %s406 = scalar_select %p405, %s26, 1
        %s407 = smul.addr %s406, 8
        %s408 = scalar_lea.vmem %s0, %s407
        %v410 = vld [vmem:[%s408] sm:$0xff]
        %v411 = vld [vmem:[%s1] sm:$0x1]
        %v412 = vld [vmem:[%s2] sm:$0x1]
        %v413 = vld [vmem:[%s6] sm:$0x1]
        %v414 = vld [vmem:[%s7] sm:$0x1]
        %v415 = vld [vmem:[%s5] sm:$0x1]
        %v416 = vld [vmem:[%s11] sm:$0x1]
        %vm417 = vcmask 261120
        %v418 = vsel %vm417, %v410, 0.0
        %419 = vadd.xlane.f32.xlu0 %v418
        %v420 = vpop.xlane.xlu0 %419
        %v421 = vrcp.pop 32.0
        %v422 = vmul.f32 %v420, %v421
        %v423 = vsub.f32 %v410, %v422
        %v424 = vmul.f32 %v423, %v423
        %v425 = vsel %vm417, %v424, 0.0
        %426 = vadd.xlane.f32.xlu0 %v425
        %v427 = vpop.xlane.xlu0 %426
        %v428 = vmul.f32 %v427, %v421
        %v429 = vadd.f32 %v428, 1e-05
        %v430 = vrsqrt.pop %v429
        %v431 = vmul.f32 %v423, %v430
        %v433 = vlaneseq
        %v434 = vshrl.u32 %v433, 7
        %v435 = vsub.s32 0, %v434
        %v436 = vrot.slane %v411, %v435
        %v438 = vmul.f32 %v431, %v436
        %v440 = vlaneseq
        %v441 = vshrl.u32 %v440, 7
        %v442 = vsub.s32 0, %v441
        %v443 = vrot.slane %v412, %v442
        %v445 = vadd.f32 %v438, %v443
        %v446 = vpack.c.bf16 %v445, %v445
        %v447 = vld [vmem:[%s3] sm:$0xf]
        %v448 = vld [vmem:[%s3 + $0x4] sm:$0xf]
        %v449 = vld [vmem:[%s3 + $0x8] sm:$0xf]
        %v450 = vld [vmem:[%s3 + $0xc] sm:$0xf]
        %v455 = vunpack.c.l.b16 %v447
        %v456 = vunpack.c.l.b16 %v448
        %v457 = vunpack.c.l.b16 %v449
        %v458 = vunpack.c.l.b16 %v450
        %v459 = vpack.c.b16 %v456, %v455
        %v460 = vpack.c.b16 %v458, %v457
        %v464 = vsel %vm417, %v446, 0
        %466 = vmatprep.subr.bf16.mxu0 0
        %467 = vmatpush1.bf16.msra.mxu0 %v459
        %468 = vmatprep.subr.bf16.mxu0 0
        %469 = vmatpush1.bf16.msra.mxu0 %v460
        %470 = vmatprep.subr.bf16.mxu0 0
        %471 = vmatpush1.bf16.msra.mxu0 0
        %472 = vmatprep.subr.bf16.mxu0 0
        %473 = vmatpush1.bf16.msra.mxu0 0
        %474 = vmatprep.subr.bf16.mxu0 0
        %475 = vmatpush1.bf16.msra.mxu0 0
        %476 = vmatprep.subr.bf16.mxu0 0
        %477 = vmatpush1.bf16.msra.mxu0 0
        %478 = vmatprep.subr.bf16.mxu0 0
        %479 = vmatpush1.bf16.msra.mxu0 0
        %480 = vmatprep.subr.bf16.mxu0 0
        %481 = vmatpush1.bf16.msra.mxu0 0
        %482 = vmatprep.subr.bf16.mxu0 0
        %483 = vmatpush1.bf16.msra.mxu0 0
        %484 = vmatprep.subr.bf16.mxu0 0
        %485 = vmatpush1.bf16.msra.mxu0 0
        %486 = vmatprep.subr.bf16.mxu0 0
        %487 = vmatpush1.bf16.msra.mxu0 0
        %488 = vmatprep.subr.bf16.mxu0 0
        %489 = vmatpush1.bf16.msra.mxu0 0
        %490 = vmatprep.subr.bf16.mxu0 0
        %491 = vmatpush1.bf16.msra.mxu0 0
        %492 = vmatprep.subr.bf16.mxu0 0
        %493 = vmatpush1.bf16.msra.mxu0 0
        %494 = vmatprep.subr.bf16.mxu0 0
        %495 = vmatpush1.bf16.msra.mxu0 0
        %496 = vmatprep.subr.bf16.mxu0 0
        %497 = vmatpush1.bf16.msra.mxu0 0
        %498 = vmatprep.mubr.bf16.mxu0 0
        %499 = vmatmul.mubr.bf16.gmra.mrb[0].mxu0 %v464
        %v500 = vpop.f32.mrb[0].mxu0
        %v501 = vadd.f32 0.0, %v500
        %v502 = vpop.f32.mrb[0].mxu0
        %v503 = vpop.f32.mrb[0].mxu0
        %v504 = vpop.f32.mrb[0].mxu0
        %505 = vdwg.mxu0
        %v506 = vpack.c.bf16 %v501, %v501
        %508 = vrot.lane.b32.xlu0 %v506, 96
        %v509 = vpop.permute.xlu0 %508
        %vm510 = vcmask 64512
        %v512 = vsel %vm510, %v506, 0
        %v515 = vsel %vm510, %v509, 0
        %517 = vmatprep.subr.bf16.mxu0 0
        %518 = vmatpush1.bf16.xpose.msra.mxu0 %v515
        %519 = vmatprep.subr.bf16.mxu0 0
        %520 = vmatpush1.bf16.xpose.msra.mxu0 0
        %521 = vmatprep.subr.bf16.mxu0 0
        %522 = vmatpush1.bf16.xpose.msra.mxu0 0
        %523 = vmatprep.subr.bf16.mxu0 0
        %524 = vmatpush1.bf16.xpose.msra.mxu0 0
        %525 = vmatprep.subr.bf16.mxu0 0
        %526 = vmatpush1.bf16.xpose.msra.mxu0 0
        %527 = vmatprep.subr.bf16.mxu0 0
        %528 = vmatpush1.bf16.xpose.msra.mxu0 0
        %529 = vmatprep.subr.bf16.mxu0 0
        %530 = vmatpush1.bf16.xpose.msra.mxu0 0
        %531 = vmatprep.subr.bf16.mxu0 0
        %532 = vmatpush1.bf16.xpose.msra.mxu0 0
        %533 = vmatprep.subr.bf16.mxu0 0
        %534 = vmatpush1.bf16.xpose.msra.mxu0 0
        %535 = vmatprep.subr.bf16.mxu0 0
        %536 = vmatpush1.bf16.xpose.msra.mxu0 0
        %537 = vmatprep.subr.bf16.mxu0 0
        %538 = vmatpush1.bf16.xpose.msra.mxu0 0
        %539 = vmatprep.subr.bf16.mxu0 0
        %540 = vmatpush1.bf16.xpose.msra.mxu0 0
        %541 = vmatprep.subr.bf16.mxu0 0
        %542 = vmatpush1.bf16.xpose.msra.mxu0 0
        %543 = vmatprep.subr.bf16.mxu0 0
        %544 = vmatpush1.bf16.xpose.msra.mxu0 0
        %545 = vmatprep.subr.bf16.mxu0 0
        %546 = vmatpush1.bf16.xpose.msra.mxu0 0
        %547 = vmatprep.subr.bf16.mxu0 0
        %548 = vmatpush1.bf16.xpose.msra.mxu0 0
        %549 = vmatprep.mubr.bf16.mxu0 0
        %550 = vmatmul.mubr.bf16.gmra.mrb[0].mxu0 %v512
        %v551 = vpop.f32.mrb[0].mxu0
        %v552 = vadd.f32 0.0, %v551
        %v553 = vpop.f32.mrb[0].mxu0
        %v554 = vpop.f32.mrb[0].mxu0
        %v555 = vpop.f32.mrb[0].mxu0
        %556 = vdwg.mxu0
        %v557 = vsel %vm510, %v552, -inf
        %558 = vmax.xlane.f32.xlu0 %v557
        %v559 = vpop.xlane.xlu0 %558
        %v560 = vsub.f32 %v552, %v559
        %v561 = vmul.f32 %v560, 1.442695
        %v562 = vpow.pop %v561
        %v563 = vsel %vm510, %v562, 0.0
        %564 = vadd.xlane.f32.xlu0 %v563
        %v565 = vpop.xlane.xlu0 %564
        %v566 = vrcp.pop %v565
        %v567 = vmul.f32 %v562, %v566
        %v568 = vpack.c.bf16 %v567, %v567
        %569 = vrot.lane.b32.xlu0 %v506, 64
        %v570 = vpop.permute.xlu0 %569
        %v572 = vsel %vm510, %v568, 0
        %vm574 = vcmask 1043456
        %v576 = vsel %vm574, %v570, 0
        %578 = vmatprep.subr.bf16.mxu0 0
        %579 = vmatpush1.bf16.msra.mxu0 %v576
        %580 = vmatprep.subr.bf16.mxu0 0
        %581 = vmatpush1.bf16.msra.mxu0 0
        %582 = vmatprep.subr.bf16.mxu0 0
        %583 = vmatpush1.bf16.msra.mxu0 0
        %584 = vmatprep.subr.bf16.mxu0 0
        %585 = vmatpush1.bf16.msra.mxu0 0
        %586 = vmatprep.subr.bf16.mxu0 0
        %587 = vmatpush1.bf16.msra.mxu0 0
        %588 = vmatprep.subr.bf16.mxu0 0
        %589 = vmatpush1.bf16.msra.mxu0 0
        %590 = vmatprep.subr.bf16.mxu0 0
        %591 = vmatpush1.bf16.msra.mxu0 0
        %592 = vmatprep.subr.bf16.mxu0 0
        %593 = vmatpush1.bf16.msra.mxu0 0
        %594 = vmatprep.subr.bf16.mxu0 0
        %595 = vmatpush1.bf16.msra.mxu0 0
        %596 = vmatprep.subr.bf16.mxu0 0
        %597 = vmatpush1.bf16.msra.mxu0 0
        %598 = vmatprep.subr.bf16.mxu0 0
        %599 = vmatpush1.bf16.msra.mxu0 0
        %600 = vmatprep.subr.bf16.mxu0 0
        %601 = vmatpush1.bf16.msra.mxu0 0
        %602 = vmatprep.subr.bf16.mxu0 0
        %603 = vmatpush1.bf16.msra.mxu0 0
        %604 = vmatprep.subr.bf16.mxu0 0
        %605 = vmatpush1.bf16.msra.mxu0 0
        %606 = vmatprep.subr.bf16.mxu0 0
        %607 = vmatpush1.bf16.msra.mxu0 0
        %608 = vmatprep.subr.bf16.mxu0 0
        %609 = vmatpush1.bf16.msra.mxu0 0
        %610 = vmatprep.mubr.bf16.mxu0 0
        %611 = vmatmul.mubr.bf16.gmra.mrb[0].mxu0 %v572
        %v612 = vpop.f32.mrb[0].mxu0
        %v613 = vadd.f32 0.0, %v612
        %v614 = vpop.f32.mrb[0].mxu0
        %v615 = vpop.f32.mrb[0].mxu0
        %v616 = vpop.f32.mrb[0].mxu0
        %617 = vdwg.mxu0
        %618 = vrot.lane.b32.xlu0 %v506, 120
        %v619 = vpop.permute.xlu0 %618
        %620 = vrot.lane.b32.xlu0 %v506, 88
        %v621 = vpop.permute.xlu0 %620
        %v623 = vsel %vm510, %v619, 0
        %v626 = vsel %vm510, %v621, 0
        %628 = vmatprep.subr.bf16.mxu0 0
        %629 = vmatpush1.bf16.xpose.msra.mxu0 %v626
        %630 = vmatprep.subr.bf16.mxu0 0
        %631 = vmatpush1.bf16.xpose.msra.mxu0 0
        %632 = vmatprep.subr.bf16.mxu0 0
        %633 = vmatpush1.bf16.xpose.msra.mxu0 0
        %634 = vmatprep.subr.bf16.mxu0 0
        %635 = vmatpush1.bf16.xpose.msra.mxu0 0
        %636 = vmatprep.subr.bf16.mxu0 0
        %637 = vmatpush1.bf16.xpose.msra.mxu0 0
        %638 = vmatprep.subr.bf16.mxu0 0
        %639 = vmatpush1.bf16.xpose.msra.mxu0 0
        %640 = vmatprep.subr.bf16.mxu0 0
        %641 = vmatpush1.bf16.xpose.msra.mxu0 0
        %642 = vmatprep.subr.bf16.mxu0 0
        %643 = vmatpush1.bf16.xpose.msra.mxu0 0
        %644 = vmatprep.subr.bf16.mxu0 0
        %645 = vmatpush1.bf16.xpose.msra.mxu0 0
        %646 = vmatprep.subr.bf16.mxu0 0
        %647 = vmatpush1.bf16.xpose.msra.mxu0 0
        %648 = vmatprep.subr.bf16.mxu0 0
        %649 = vmatpush1.bf16.xpose.msra.mxu0 0
        %650 = vmatprep.subr.bf16.mxu0 0
        %651 = vmatpush1.bf16.xpose.msra.mxu0 0
        %652 = vmatprep.subr.bf16.mxu0 0
        %653 = vmatpush1.bf16.xpose.msra.mxu0 0
        %654 = vmatprep.subr.bf16.mxu0 0
        %655 = vmatpush1.bf16.xpose.msra.mxu0 0
        %656 = vmatprep.subr.bf16.mxu0 0
        %657 = vmatpush1.bf16.xpose.msra.mxu0 0
        %658 = vmatprep.subr.bf16.mxu0 0
        %659 = vmatpush1.bf16.xpose.msra.mxu0 0
        %660 = vmatprep.mubr.bf16.mxu0 0
        %661 = vmatmul.mubr.bf16.gmra.mrb[0].mxu0 %v623
        %v662 = vpop.f32.mrb[0].mxu0
        %v663 = vadd.f32 0.0, %v662
        %v664 = vpop.f32.mrb[0].mxu0
        %v665 = vpop.f32.mrb[0].mxu0
        %v666 = vpop.f32.mrb[0].mxu0
        %667 = vdwg.mxu0
        %v668 = vsel %vm510, %v663, -inf
        %669 = vmax.xlane.f32.xlu0 %v668
        %v670 = vpop.xlane.xlu0 %669
        %v671 = vsub.f32 %v663, %v670
        %v672 = vmul.f32 %v671, 1.442695
        %v673 = vpow.pop %v672
        %v674 = vsel %vm510, %v673, 0.0
        %675 = vadd.xlane.f32.xlu0 %v674
        %v676 = vpop.xlane.xlu0 %675
        %v677 = vrcp.pop %v676
        %v678 = vmul.f32 %v673, %v677
        %v679 = vpack.c.bf16 %v678, %v678
        %680 = vrot.lane.b32.xlu0 %v506, 56
        %v681 = vpop.permute.xlu0 %680
        %v683 = vsel %vm510, %v679, 0
        %v686 = vsel %vm574, %v681, 0
        %688 = vmatprep.subr.bf16.mxu0 0
        %689 = vmatpush1.bf16.msra.mxu0 %v686
        %690 = vmatprep.subr.bf16.mxu0 0
        %691 = vmatpush1.bf16.msra.mxu0 0
        %692 = vmatprep.subr.bf16.mxu0 0
        %693 = vmatpush1.bf16.msra.mxu0 0
        %694 = vmatprep.subr.bf16.mxu0 0
        %695 = vmatpush1.bf16.msra.mxu0 0
        %696 = vmatprep.subr.bf16.mxu0 0
        %697 = vmatpush1.bf16.msra.mxu0 0
        %698 = vmatprep.subr.bf16.mxu0 0
        %699 = vmatpush1.bf16.msra.mxu0 0
        %700 = vmatprep.subr.bf16.mxu0 0
        %701 = vmatpush1.bf16.msra.mxu0 0
        %702 = vmatprep.subr.bf16.mxu0 0
        %703 = vmatpush1.bf16.msra.mxu0 0
        %704 = vmatprep.subr.bf16.mxu0 0
        %705 = vmatpush1.bf16.msra.mxu0 0
        %706 = vmatprep.subr.bf16.mxu0 0
        %707 = vmatpush1.bf16.msra.mxu0 0
        %708 = vmatprep.subr.bf16.mxu0 0
        %709 = vmatpush1.bf16.msra.mxu0 0
        %710 = vmatprep.subr.bf16.mxu0 0
        %711 = vmatpush1.bf16.msra.mxu0 0
        %712 = vmatprep.subr.bf16.mxu0 0
        %713 = vmatpush1.bf16.msra.mxu0 0
        %714 = vmatprep.subr.bf16.mxu0 0
        %715 = vmatpush1.bf16.msra.mxu0 0
        %716 = vmatprep.subr.bf16.mxu0 0
        %717 = vmatpush1.bf16.msra.mxu0 0
        %718 = vmatprep.subr.bf16.mxu0 0
        %719 = vmatpush1.bf16.msra.mxu0 0
        %720 = vmatprep.mubr.bf16.mxu0 0
        %721 = vmatmul.mubr.bf16.gmra.mrb[0].mxu0 %v683
        %v722 = vpop.f32.mrb[0].mxu0
        %v723 = vadd.f32 0.0, %v722
        %v724 = vpop.f32.mrb[0].mxu0
        %v725 = vpop.f32.mrb[0].mxu0
        %v726 = vpop.f32.mrb[0].mxu0
        %727 = vdwg.mxu0
        %728 = vrot.lane.b32.xlu0 %v506, 112
        %v729 = vpop.permute.xlu0 %728
        %730 = vrot.lane.b32.xlu0 %v506, 80
        %v731 = vpop.permute.xlu0 %730
        %v733 = vsel %vm510, %v729, 0
        %v736 = vsel %vm510, %v731, 0
        %738 = vmatprep.subr.bf16.mxu0 0
        %739 = vmatpush1.bf16.xpose.msra.mxu0 %v736
        %740 = vmatprep.subr.bf16.mxu0 0
        %741 = vmatpush1.bf16.xpose.msra.mxu0 0
        %742 = vmatprep.subr.bf16.mxu0 0
        %743 = vmatpush1.bf16.xpose.msra.mxu0 0
        %744 = vmatprep.subr.bf16.mxu0 0
        %745 = vmatpush1.bf16.xpose.msra.mxu0 0
        %746 = vmatprep.subr.bf16.mxu0 0
        %747 = vmatpush1.bf16.xpose.msra.mxu0 0
        %748 = vmatprep.subr.bf16.mxu0 0
        %749 = vmatpush1.bf16.xpose.msra.mxu0 0
        %750 = vmatprep.subr.bf16.mxu0 0
        %751 = vmatpush1.bf16.xpose.msra.mxu0 0
        %752 = vmatprep.subr.bf16.mxu0 0
        %753 = vmatpush1.bf16.xpose.msra.mxu0 0
        %754 = vmatprep.subr.bf16.mxu0 0
        %755 = vmatpush1.bf16.xpose.msra.mxu0 0
        %756 = vmatprep.subr.bf16.mxu0 0
        %757 = vmatpush1.bf16.xpose.msra.mxu0 0
        %758 = vmatprep.subr.bf16.mxu0 0
        %759 = vmatpush1.bf16.xpose.msra.mxu0 0
        %760 = vmatprep.subr.bf16.mxu0 0
        %761 = vmatpush1.bf16.xpose.msra.mxu0 0
        %762 = vmatprep.subr.bf16.mxu0 0
        %763 = vmatpush1.bf16.xpose.msra.mxu0 0
        %764 = vmatprep.subr.bf16.mxu0 0
        %765 = vmatpush1.bf16.xpose.msra.mxu0 0
        %766 = vmatprep.subr.bf16.mxu0 0
        %767 = vmatpush1.bf16.xpose.msra.mxu0 0
        %768 = vmatprep.subr.bf16.mxu0 0
        %769 = vmatpush1.bf16.xpose.msra.mxu0 0
        %770 = vmatprep.mubr.bf16.mxu0 0
        %771 = vmatmul.mubr.bf16.gmra.mrb[0].mxu0 %v733
        %v772 = vpop.f32.mrb[0].mxu0
        %v773 = vadd.f32 0.0, %v772
        %v774 = vpop.f32.mrb[0].mxu0
        %v775 = vpop.f32.mrb[0].mxu0
        %v776 = vpop.f32.mrb[0].mxu0
        %777 = vdwg.mxu0
        %v778 = vsel %vm510, %v773, -inf
        %779 = vmax.xlane.f32.xlu0 %v778
        %v780 = vpop.xlane.xlu0 %779
        %v781 = vsub.f32 %v773, %v780
        %v782 = vmul.f32 %v781, 1.442695
        %v783 = vpow.pop %v782
        %v784 = vsel %vm510, %v783, 0.0
        %785 = vadd.xlane.f32.xlu0 %v784
        %v786 = vpop.xlane.xlu0 %785
        %v787 = vrcp.pop %v786
        %v788 = vmul.f32 %v783, %v787
        %v789 = vpack.c.bf16 %v788, %v788
        %790 = vrot.lane.b32.xlu0 %v506, 48
        %v791 = vpop.permute.xlu0 %790
        %v793 = vsel %vm510, %v789, 0
        %v796 = vsel %vm574, %v791, 0
        %798 = vmatprep.subr.bf16.mxu0 0
        %799 = vmatpush1.bf16.msra.mxu0 %v796
        %800 = vmatprep.subr.bf16.mxu0 0
        %801 = vmatpush1.bf16.msra.mxu0 0
        %802 = vmatprep.subr.bf16.mxu0 0
        %803 = vmatpush1.bf16.msra.mxu0 0
        %804 = vmatprep.subr.bf16.mxu0 0
        %805 = vmatpush1.bf16.msra.mxu0 0
        %806 = vmatprep.subr.bf16.mxu0 0
        %807 = vmatpush1.bf16.msra.mxu0 0
        %808 = vmatprep.subr.bf16.mxu0 0
        %809 = vmatpush1.bf16.msra.mxu0 0
        %810 = vmatprep.subr.bf16.mxu0 0
        %811 = vmatpush1.bf16.msra.mxu0 0
        %812 = vmatprep.subr.bf16.mxu0 0
        %813 = vmatpush1.bf16.msra.mxu0 0
        %814 = vmatprep.subr.bf16.mxu0 0
        %815 = vmatpush1.bf16.msra.mxu0 0
        %816 = vmatprep.subr.bf16.mxu0 0
        %817 = vmatpush1.bf16.msra.mxu0 0
        %818 = vmatprep.subr.bf16.mxu0 0
        %819 = vmatpush1.bf16.msra.mxu0 0
        %820 = vmatprep.subr.bf16.mxu0 0
        %821 = vmatpush1.bf16.msra.mxu0 0
        %822 = vmatprep.subr.bf16.mxu0 0
        %823 = vmatpush1.bf16.msra.mxu0 0
        %824 = vmatprep.subr.bf16.mxu0 0
        %825 = vmatpush1.bf16.msra.mxu0 0
        %826 = vmatprep.subr.bf16.mxu0 0
        %827 = vmatpush1.bf16.msra.mxu0 0
        %828 = vmatprep.subr.bf16.mxu0 0
        %829 = vmatpush1.bf16.msra.mxu0 0
        %830 = vmatprep.mubr.bf16.mxu0 0
        %831 = vmatmul.mubr.bf16.gmra.mrb[0].mxu0 %v793
        %v832 = vpop.f32.mrb[0].mxu0
        %v833 = vadd.f32 0.0, %v832
        %v834 = vpop.f32.mrb[0].mxu0
        %v835 = vpop.f32.mrb[0].mxu0
        %v836 = vpop.f32.mrb[0].mxu0
        %837 = vdwg.mxu0
        %838 = vrot.lane.b32.xlu0 %v506, 104
        %v839 = vpop.permute.xlu0 %838
        %840 = vrot.lane.b32.xlu0 %v506, 72
        %v841 = vpop.permute.xlu0 %840
        %v843 = vsel %vm510, %v839, 0
        %v846 = vsel %vm510, %v841, 0
        %848 = vmatprep.subr.bf16.mxu0 0
        %849 = vmatpush1.bf16.xpose.msra.mxu0 %v846
        %850 = vmatprep.subr.bf16.mxu0 0
        %851 = vmatpush1.bf16.xpose.msra.mxu0 0
        %852 = vmatprep.subr.bf16.mxu0 0
        %853 = vmatpush1.bf16.xpose.msra.mxu0 0
        %854 = vmatprep.subr.bf16.mxu0 0
        %855 = vmatpush1.bf16.xpose.msra.mxu0 0
        %856 = vmatprep.subr.bf16.mxu0 0
        %857 = vmatpush1.bf16.xpose.msra.mxu0 0
        %858 = vmatprep.subr.bf16.mxu0 0
        %859 = vmatpush1.bf16.xpose.msra.mxu0 0
        %860 = vmatprep.subr.bf16.mxu0 0
        %861 = vmatpush1.bf16.xpose.msra.mxu0 0
        %862 = vmatprep.subr.bf16.mxu0 0
        %863 = vmatpush1.bf16.xpose.msra.mxu0 0
        %864 = vmatprep.subr.bf16.mxu0 0
        %865 = vmatpush1.bf16.xpose.msra.mxu0 0
        %866 = vmatprep.subr.bf16.mxu0 0
        %867 = vmatpush1.bf16.xpose.msra.mxu0 0
        %868 = vmatprep.subr.bf16.mxu0 0
        %869 = vmatpush1.bf16.xpose.msra.mxu0 0
        %870 = vmatprep.subr.bf16.mxu0 0
        %871 = vmatpush1.bf16.xpose.msra.mxu0 0
        %872 = vmatprep.subr.bf16.mxu0 0
        %873 = vmatpush1.bf16.xpose.msra.mxu0 0
        %874 = vmatprep.subr.bf16.mxu0 0
        %875 = vmatpush1.bf16.xpose.msra.mxu0 0
        %876 = vmatprep.subr.bf16.mxu0 0
        %877 = vmatpush1.bf16.xpose.msra.mxu0 0
        %878 = vmatprep.subr.bf16.mxu0 0
        %879 = vmatpush1.bf16.xpose.msra.mxu0 0
        %880 = vmatprep.mubr.bf16.mxu0 0
        %881 = vmatmul.mubr.bf16.gmra.mrb[0].mxu0 %v843
        %v882 = vpop.f32.mrb[0].mxu0
        %v883 = vadd.f32 0.0, %v882
        %v884 = vpop.f32.mrb[0].mxu0
        %v885 = vpop.f32.mrb[0].mxu0
        %v886 = vpop.f32.mrb[0].mxu0
        %887 = vdwg.mxu0
        %v888 = vsel %vm510, %v883, -inf
        %889 = vmax.xlane.f32.xlu0 %v888
        %v890 = vpop.xlane.xlu0 %889
        %v891 = vsub.f32 %v883, %v890
        %v892 = vmul.f32 %v891, 1.442695
        %v893 = vpow.pop %v892
        %v894 = vsel %vm510, %v893, 0.0
        %895 = vadd.xlane.f32.xlu0 %v894
        %v896 = vpop.xlane.xlu0 %895
        %v897 = vrcp.pop %v896
        %v898 = vmul.f32 %v893, %v897
        %v899 = vpack.c.bf16 %v898, %v898
        %900 = vrot.lane.b32.xlu0 %v506, 40
        %v901 = vpop.permute.xlu0 %900
        %v903 = vsel %vm510, %v899, 0
        %v906 = vsel %vm574, %v901, 0
        %908 = vmatprep.subr.bf16.mxu0 0
        %909 = vmatpush1.bf16.msra.mxu0 %v906
        %910 = vmatprep.subr.bf16.mxu0 0
        %911 = vmatpush1.bf16.msra.mxu0 0
        %912 = vmatprep.subr.bf16.mxu0 0
        %913 = vmatpush1.bf16.msra.mxu0 0
        %914 = vmatprep.subr.bf16.mxu0 0
        %915 = vmatpush1.bf16.msra.mxu0 0
        %916 = vmatprep.subr.bf16.mxu0 0
        %917 = vmatpush1.bf16.msra.mxu0 0
        %918 = vmatprep.subr.bf16.mxu0 0
        %919 = vmatpush1.bf16.msra.mxu0 0
        %920 = vmatprep.subr.bf16.mxu0 0
        %921 = vmatpush1.bf16.msra.mxu0 0
        %922 = vmatprep.subr.bf16.mxu0 0
        %923 = vmatpush1.bf16.msra.mxu0 0
        %924 = vmatprep.subr.bf16.mxu0 0
        %925 = vmatpush1.bf16.msra.mxu0 0
        %926 = vmatprep.subr.bf16.mxu0 0
        %927 = vmatpush1.bf16.msra.mxu0 0
        %928 = vmatprep.subr.bf16.mxu0 0
        %929 = vmatpush1.bf16.msra.mxu0 0
        %930 = vmatprep.subr.bf16.mxu0 0
        %931 = vmatpush1.bf16.msra.mxu0 0
        %932 = vmatprep.subr.bf16.mxu0 0
        %933 = vmatpush1.bf16.msra.mxu0 0
        %934 = vmatprep.subr.bf16.mxu0 0
        %935 = vmatpush1.bf16.msra.mxu0 0
        %936 = vmatprep.subr.bf16.mxu0 0
        %937 = vmatpush1.bf16.msra.mxu0 0
        %938 = vmatprep.subr.bf16.mxu0 0
        %939 = vmatpush1.bf16.msra.mxu0 0
        %940 = vmatprep.mubr.bf16.mxu0 0
        %941 = vmatmul.mubr.bf16.gmra.mrb[0].mxu0 %v903
        %v942 = vpop.f32.mrb[0].mxu0
        %v943 = vadd.f32 0.0, %v942
        %v944 = vpop.f32.mrb[0].mxu0
        %v945 = vpop.f32.mrb[0].mxu0
        %v946 = vpop.f32.mrb[0].mxu0
        %947 = vdwg.mxu0
        %949 = vrot.lane.b32.xlu0 %v723, 8
        %v950 = vpop.permute.xlu0 %949
        %953 = vrot.lane.b32.xlu0 %v833, 16
        %v954 = vpop.permute.xlu0 %953
        %957 = vrot.lane.b32.xlu0 %v943, 24
        %v958 = vpop.permute.xlu0 %957
        %v960 = vsel %vm510, %v613, %v950
        %vm961 = vcmask 130048
        %v962 = vsel %vm961, %v960, %v954
        %vm963 = vcmask 195584
        %v964 = vsel %vm963, %v962, %v958
        %v965 = vpack.c.bf16 %v964, %v964
        %v966 = vld [vmem:[%s4] sm:$0xf]
        %v967 = vld [vmem:[%s4 + $0x4] sm:$0xf]
        %v968 = vld [vmem:[%s4 + $0x8] sm:$0xf]
        %v969 = vld [vmem:[%s4 + $0xc] sm:$0xf]
        %v971 = vlaneseq
        %v972 = vshrl.u32 %v971, 7
        %v973 = vsub.s32 0, %v972
        %v974 = vrot.slane %v415, %v973
        %v980 = vunpack.c.l.b16 %v966
        %v981 = vunpack.c.l.b16 %v967
        %v982 = vunpack.c.l.b16 %v968
        %v983 = vunpack.c.l.b16 %v969
        %v984 = vpack.c.b16 %v981, %v980
        %v985 = vpack.c.b16 %v983, %v982
        %v989 = vsel %vm417, %v965, 0
        %991 = vmatprep.subr.bf16.mxu0 0
        %992 = vmatpush1.bf16.msra.mxu0 %v984
        %993 = vmatprep.subr.bf16.mxu0 0
        %994 = vmatpush1.bf16.msra.mxu0 %v985
        %995 = vmatprep.subr.bf16.mxu0 0
        %996 = vmatpush1.bf16.msra.mxu0 0
        %997 = vmatprep.subr.bf16.mxu0 0
        %998 = vmatpush1.bf16.msra.mxu0 0
        %999 = vmatprep.subr.bf16.mxu0 0
        %1000 = vmatpush1.bf16.msra.mxu0 0
        %1001 = vmatprep.subr.bf16.mxu0 0
        %1002 = vmatpush1.bf16.msra.mxu0 0
        %1003 = vmatprep.subr.bf16.mxu0 0
        %1004 = vmatpush1.bf16.msra.mxu0 0
        %1005 = vmatprep.subr.bf16.mxu0 0
        %1006 = vmatpush1.bf16.msra.mxu0 0
        %1007 = vmatprep.subr.bf16.mxu0 0
        %1008 = vmatpush1.bf16.msra.mxu0 0
        %1009 = vmatprep.subr.bf16.mxu0 0
        %1010 = vmatpush1.bf16.msra.mxu0 0
        %1011 = vmatprep.subr.bf16.mxu0 0
        %1012 = vmatpush1.bf16.msra.mxu0 0
        %1013 = vmatprep.subr.bf16.mxu0 0
        %1014 = vmatpush1.bf16.msra.mxu0 0
        %1015 = vmatprep.subr.bf16.mxu0 0
        %1016 = vmatpush1.bf16.msra.mxu0 0
        %1017 = vmatprep.subr.bf16.mxu0 0
        %1018 = vmatpush1.bf16.msra.mxu0 0
        %1019 = vmatprep.subr.bf16.mxu0 0
        %1020 = vmatpush1.bf16.msra.mxu0 0
        %1021 = vmatprep.subr.bf16.mxu0 0
        %1022 = vmatpush1.bf16.msra.mxu0 0
        %1023 = vmatprep.mubr.bf16.mxu0 0
        %1024 = vmatmul.mubr.bf16.gmra.mrb[0].mxu0 %v989
        %v1025 = vpop.f32.mrb[0].mxu0
        %v1026 = vadd.f32 %v974, %v1025
        %v1027 = vpop.f32.mrb[0].mxu0
        %v1028 = vpop.f32.mrb[0].mxu0
        %v1029 = vpop.f32.mrb[0].mxu0
        %1030 = vdwg.mxu0
        %v1031 = vadd.f32 %v410, %v1026
        %v1032 = vsel %vm417, %v1031, 0.0
        %1033 = vadd.xlane.f32.xlu0 %v1032
        %v1034 = vpop.xlane.xlu0 %1033
        %v1035 = vmul.f32 %v1034, %v421
        %v1036 = vsub.f32 %v1031, %v1035
        %v1037 = vmul.f32 %v1036, %v1036
        %v1038 = vsel %vm417, %v1037, 0.0
        %1039 = vadd.xlane.f32.xlu0 %v1038
        %v1040 = vpop.xlane.xlu0 %1039
        %v1041 = vmul.f32 %v1040, %v421
        %v1042 = vadd.f32 %v1041, 1e-05
        %v1043 = vrsqrt.pop %v1042
        %v1044 = vmul.f32 %v1036, %v1043
        %v1046 = vlaneseq
        %v1047 = vshrl.u32 %v1046, 7
        %v1048 = vsub.s32 0, %v1047
        %v1049 = vrot.slane %v413, %v1048
        %v1051 = vmul.f32 %v1044, %v1049
        %v1053 = vlaneseq
        %v1054 = vshrl.u32 %v1053, 7
        %v1055 = vsub.s32 0, %v1054
        %v1056 = vrot.slane %v414, %v1055
        %v1058 = vadd.f32 %v1051, %v1056
        %v1059 = vpack.c.bf16 %v1058, %v1058
        %v1060 = vld [vmem:[%s8] sm:$0xf]
        %v1061 = vld [vmem:[%s8 + $0x4] sm:$0xf]
        %v1062 = vld [vmem:[%s8 + $0x8] sm:$0xf]
        %v1063 = vld [vmem:[%s8 + $0xc] sm:$0xf]
        %v1064 = vld [vmem:[%s9] sm:$0x1]
        %v1066 = vlaneseq
        %v1067 = vshrl.u32 %v1066, 7
        %v1068 = vsub.s32 0, %v1067
        %v1069 = vrot.slane %v1064, %v1068
        %v1075 = vunpack.c.l.b16 %v1060
        %v1076 = vunpack.c.l.b16 %v1061
        %v1077 = vunpack.c.l.b16 %v1062
        %v1078 = vunpack.c.l.b16 %v1063
        %v1079 = vpack.c.b16 %v1076, %v1075
        %v1080 = vpack.c.b16 %v1078, %v1077
        %v1084 = vsel %vm417, %v1059, 0
        %1086 = vmatprep.subr.bf16.mxu0 0
        %1087 = vmatpush1.bf16.msra.mxu0 %v1079
        %1088 = vmatprep.subr.bf16.mxu0 0
        %1089 = vmatpush1.bf16.msra.mxu0 %v1080
        %1090 = vmatprep.subr.bf16.mxu0 0
        %1091 = vmatpush1.bf16.msra.mxu0 0
        %1092 = vmatprep.subr.bf16.mxu0 0
        %1093 = vmatpush1.bf16.msra.mxu0 0
        %1094 = vmatprep.subr.bf16.mxu0 0
        %1095 = vmatpush1.bf16.msra.mxu0 0
        %1096 = vmatprep.subr.bf16.mxu0 0
        %1097 = vmatpush1.bf16.msra.mxu0 0
        %1098 = vmatprep.subr.bf16.mxu0 0
        %1099 = vmatpush1.bf16.msra.mxu0 0
        %1100 = vmatprep.subr.bf16.mxu0 0
        %1101 = vmatpush1.bf16.msra.mxu0 0
        %1102 = vmatprep.subr.bf16.mxu0 0
        %1103 = vmatpush1.bf16.msra.mxu0 0
        %1104 = vmatprep.subr.bf16.mxu0 0
        %1105 = vmatpush1.bf16.msra.mxu0 0
        %1106 = vmatprep.subr.bf16.mxu0 0
        %1107 = vmatpush1.bf16.msra.mxu0 0
        %1108 = vmatprep.subr.bf16.mxu0 0
        %1109 = vmatpush1.bf16.msra.mxu0 0
        %1110 = vmatprep.subr.bf16.mxu0 0
        %1111 = vmatpush1.bf16.msra.mxu0 0
        %1112 = vmatprep.subr.bf16.mxu0 0
        %1113 = vmatpush1.bf16.msra.mxu0 0
        %1114 = vmatprep.subr.bf16.mxu0 0
        %1115 = vmatpush1.bf16.msra.mxu0 0
        %1116 = vmatprep.subr.bf16.mxu0 0
        %1117 = vmatpush1.bf16.msra.mxu0 0
        %1118 = vmatprep.mubr.bf16.mxu0 0
        %1119 = vmatmul.mubr.bf16.gmra.mrb[0].mxu0 %v1084
        %v1120 = vpop.f32.mrb[0].mxu0
        %v1121 = vadd.f32 %v1069, %v1120
        %v1122 = vpop.f32.mrb[0].mxu0
        %v1123 = vpop.f32.mrb[0].mxu0
        %v1124 = vpop.f32.mrb[0].mxu0
        %1125 = vdwg.mxu0
        %v1126 = vmax.f32 %v1121, 0.0
        %v1127 = vpack.c.bf16 %v1126, %v1126
        %v1128 = vld [vmem:[%s10] sm:$0xf]
        %v1129 = vld [vmem:[%s10 + $0x4] sm:$0xf]
        %v1130 = vld [vmem:[%s10 + $0x8] sm:$0xf]
        %v1131 = vld [vmem:[%s10 + $0xc] sm:$0xf]
        %v1132 = vld [vmem:[%s10 + $0x10] sm:$0xf]
        %v1133 = vld [vmem:[%s10 + $0x14] sm:$0xf]
        %v1134 = vld [vmem:[%s10 + $0x18] sm:$0xf]
        %v1135 = vld [vmem:[%s10 + $0x1c] sm:$0xf]
        %v1136 = vld [vmem:[%s10 + $0x20] sm:$0xf]
        %v1137 = vld [vmem:[%s10 + $0x24] sm:$0xf]
        %v1138 = vld [vmem:[%s10 + $0x28] sm:$0xf]
        %v1139 = vld [vmem:[%s10 + $0x2c] sm:$0xf]
        %v1140 = vld [vmem:[%s10 + $0x30] sm:$0xf]
        %v1141 = vld [vmem:[%s10 + $0x34] sm:$0xf]
        %v1142 = vld [vmem:[%s10 + $0x38] sm:$0xf]
        %v1143 = vld [vmem:[%s10 + $0x3c] sm:$0xf]
        %v1145 = vlaneseq
        %v1146 = vshrl.u32 %v1145, 7
        %v1147 = vsub.s32 0, %v1146
        %v1148 = vrot.slane %v416, %v1147
        %v1166 = vunpack.c.l.b16 %v1128
        %v1167 = vunpack.c.l.b16 %v1129
        %v1168 = vunpack.c.l.b16 %v1130
        %v1169 = vunpack.c.l.b16 %v1131
        %v1170 = vunpack.c.l.b16 %v1132
        %v1171 = vunpack.c.l.b16 %v1133
        %v1172 = vunpack.c.l.b16 %v1134
        %v1173 = vunpack.c.l.b16 %v1135
        %v1174 = vunpack.c.l.b16 %v1136
        %v1175 = vunpack.c.l.b16 %v1137
        %v1176 = vunpack.c.l.b16 %v1138
        %v1177 = vunpack.c.l.b16 %v1139
        %v1178 = vunpack.c.l.b16 %v1140
        %v1179 = vunpack.c.l.b16 %v1141
        %v1180 = vunpack.c.l.b16 %v1142
        %v1181 = vunpack.c.l.b16 %v1143
        %v1182 = vpack.c.b16 %v1167, %v1166
        %v1183 = vpack.c.b16 %v1169, %v1168
        %v1184 = vpack.c.b16 %v1171, %v1170
        %v1185 = vpack.c.b16 %v1173, %v1172
        %v1186 = vpack.c.b16 %v1175, %v1174
        %v1187 = vpack.c.b16 %v1177, %v1176
        %v1188 = vpack.c.b16 %v1179, %v1178
        %v1189 = vpack.c.b16 %v1181, %v1180
        %1198 = vmatprep.subr.bf16.mxu0 0
        %1199 = vmatpush1.bf16.msra.mxu0 %v1182
        %1200 = vmatprep.subr.bf16.mxu0 0
        %1201 = vmatpush1.bf16.msra.mxu0 %v1183
        %1202 = vmatprep.subr.bf16.mxu0 0
        %1203 = vmatpush1.bf16.msra.mxu0 %v1184
        %1204 = vmatprep.subr.bf16.mxu0 0
        %1205 = vmatpush1.bf16.msra.mxu0 %v1185
        %1206 = vmatprep.subr.bf16.mxu0 0
        %1207 = vmatpush1.bf16.msra.mxu0 %v1186
        %1208 = vmatprep.subr.bf16.mxu0 0
        %1209 = vmatpush1.bf16.msra.mxu0 %v1187
        %1210 = vmatprep.subr.bf16.mxu0 0
        %1211 = vmatpush1.bf16.msra.mxu0 %v1188
        %1212 = vmatprep.subr.bf16.mxu0 0
        %1213 = vmatpush1.bf16.msra.mxu0 %v1189
        %1214 = vmatprep.subr.bf16.mxu0 0
        %1215 = vmatpush1.bf16.msra.mxu0 0
        %1216 = vmatprep.subr.bf16.mxu0 0
        %1217 = vmatpush1.bf16.msra.mxu0 0
        %1218 = vmatprep.subr.bf16.mxu0 0
        %1219 = vmatpush1.bf16.msra.mxu0 0
        %1220 = vmatprep.subr.bf16.mxu0 0
        %1221 = vmatpush1.bf16.msra.mxu0 0
        %1222 = vmatprep.subr.bf16.mxu0 0
        %1223 = vmatpush1.bf16.msra.mxu0 0
        %1224 = vmatprep.subr.bf16.mxu0 0
        %1225 = vmatpush1.bf16.msra.mxu0 0
        %1226 = vmatprep.subr.bf16.mxu0 0
        %1227 = vmatpush1.bf16.msra.mxu0 0
        %1228 = vmatprep.subr.bf16.mxu0 0
        %1229 = vmatpush1.bf16.msra.mxu0 0
        %1230 = vmatprep.mubr.bf16.mxu0 0
        %1231 = vmatmul.mubr.bf16.gmra.mrb[0].mxu0 %v1127
        %v1232 = vpop.f32.mrb[0].mxu0
        %v1233 = vadd.f32 %v1148, %v1232
        %v1234 = vpop.f32.mrb[0].mxu0
        %v1235 = vpop.f32.mrb[0].mxu0
        %v1236 = vpop.f32.mrb[0].mxu0
        %1237 = vdwg.mxu0
        %v1238 = vadd.f32 %v1031, %v1233
        %1239 = vst.msk [vmem:[%s404] sm:$0xff] %vm417, %v1238
        %s1240 = sand.u32 %s291, 1
        %s1241 = scalar_lea.sflag [#allocation3], %s1240
        %s1242 = sand.u32 %s291, 1
        %s1243 = smul.addr %s1242, 8
        %s1244 = scalar_lea.vmem [#allocation2], %s1243
        // Predicated region
        $region69: #{tpu_custom_call.1} parent=67 // pred_check
          %p1245 = pneg %p301
        $region70: #{tpu_custom_call.1} parent=67 // pred_check_branch
          %1247 = sbr.rel (%p1245) target = $region72
        $region71: #{tpu_custom_call.1} parent=67 // pred_region
          %s1249 = ssub.s32 128, 128
          %1250 = vsyncadd %s1241, %s1249
          %s1251 = smul.addr %s26, 128
          %s1252 = scalar_lea.hbm %s12, %s1251
          %s1254 = sshll.u32 %s1244, 4
          %s1255 = int_to_ptr.vmem [resolvable:$true] %s1254
          %1257 = dma.vmem_to_hbm [thread:$0]  %s1255, 128, %s1252, %s1241
        $region72: #{tpu_custom_call.1} parent=67 // pred_fallthru
          _
      $region68: #{tpu_custom_call.1} parent=5 // pred_fallthru
        _
      %p1258 = scmp.le.s32.totalorder 2, %s21
      // Predicated region
      $region73: #{tpu_custom_call.1} parent=5 // pred_check
        %p1259 = pneg %p1258
      $region74: #{tpu_custom_call.1} parent=5 // pred_check_branch
        %1261 = sbr.rel (%p1259) target = $region76
      $region75: #{tpu_custom_call.1} parent=5 // pred_region
        %s1262 = ssub.s32 %s21, 2
        // Predicated region
        $region77: #{tpu_custom_call.1} parent=75 // pred_check
          %p1263 = pneg %p307
        $region78: #{tpu_custom_call.1} parent=75 // pred_check_branch
          %1265 = sbr.rel (%p1263) target = $region80
        $region79: #{tpu_custom_call.1} parent=75 // pred_region
          %s1266 = sand.u32 %s292, 1
          %s1267 = scalar_lea.sflag [#allocation3], %s1266
          %s1268 = sand.u32 %s292, 1
          %s1269 = smul.addr %s1268, 8
          %s1270 = scalar_lea.vmem [#allocation2], %s1269
          %1271 = dma.done %s1267, 128
        $region80: #{tpu_custom_call.1} parent=75 // pred_fallthru
          _
      $region76: #{tpu_custom_call.1} parent=5 // pred_fallthru
        _
    $region6: #{tpu_custom_call.1} parent=1 // loop_footer
      %s25 = sadd.s32 1, %s21
    $region7: #{tpu_custom_call.1} parent=1 // loop_footer_branch
      %20 = sbr.rel target = $region3
    $region8: #{tpu_custom_call.1} parent=1 // loop_exit
      _
    %1272 = vsyncpa [#allocation3], 1
    %s1273 = scalar_lea.sflag [#allocation3], 1
    %1274 = vsyncpa %s1273, 1

</llo_original>
